<compile_context>
chip_gen: v7x
topology: tpu7x:2x2x1
jax: 0.10.0
libtpu: 0.0.40
codegen_flags: <defaults>
</compile_context>

<pallas_src>
import math

import jax
import jax.numpy as jnp
from jax import lax
from jax.experimental import pallas as pl
from jax.experimental.pallas import tpu as pltpu

L_DEFAULT = 4
FC_DIM = 18
RNN_DIM = 18
N_FFT = 1024
HOP = 256


def _round_up(x, m):
    return ((x + m - 1) // m) * m


# ----------------------------------------------------------------------------
# Plain-JAX glue: STFT / ISTFT (torch.stft / torch.istft semantics, center=True,
# reflect pad, periodic hann window, onesided, not normalized).
# TODO(synk): FFT has no Pallas primitive; done with jnp.fft in the wrapper.
# ----------------------------------------------------------------------------
def _hann(n_fft):
    return (0.5 * (1.0 - jnp.cos(2.0 * jnp.pi * jnp.arange(n_fft) / n_fft))).astype(
        jnp.float32
    )


def _stft(sig, n_fft=N_FFT, hop=HOP):
    win = _hann(n_fft)
    pad = n_fft // 2
    sigp = jnp.pad(sig, (pad, pad), mode="reflect")
    n_frames = 1 + (sigp.shape[0] - n_fft) // hop
    idx = jnp.arange(n_frames)[:, None] * hop + jnp.arange(n_fft)[None, :]
    frames = sigp[idx] * win[None, :]
    spec = jnp.fft.rfft(frames, axis=-1)          # (T, F) complex64
    return jnp.swapaxes(spec, 0, 1)               # (F, T)


def _istft(spec, n_fft=N_FFT, hop=HOP):
    win = _hann(n_fft)
    n_frames = spec.shape[1]
    frames = jnp.fft.irfft(jnp.swapaxes(spec, 0, 1), n=n_fft, axis=-1)
    frames = frames * win[None, :]
    out_len = n_fft + hop * (n_frames - 1)
    idx = (jnp.arange(n_frames)[:, None] * hop + jnp.arange(n_fft)[None, :]).reshape(-1)
    sig = jnp.zeros(out_len, jnp.float32).at[idx].add(frames.reshape(-1))
    wsq = jnp.zeros(out_len, jnp.float32).at[idx].add(
        jnp.broadcast_to(win[None, :] ** 2, (n_frames, n_fft)).reshape(-1)
    )
    sig = sig / jnp.where(wsq > 1e-11, wsq, 1.0)
    pad = n_fft // 2
    return sig[pad: pad + hop * (n_frames - 1)]


# ----------------------------------------------------------------------------
# Deterministic parameter init (shapes from KGNet(L=4, fc_dim=18, rnn_dim=18)).
# Linear weights stored as (in, out); GRU as (in, 3H)/(H, 3H), gate order [r,z,n];
# complex layers as separate re/im matrices; PReLU alphas shared re/im.
# ----------------------------------------------------------------------------
def init_params(key, L=L_DEFAULT, fc_dim=FC_DIM, rnn_dim=RNN_DIM):
    keys = jax.random.split(key, 8)

    def lin(k, fi, fo):
        k1, k2 = jax.random.split(k)
        b = 1.0 / math.sqrt(fi)
        return (
            jax.random.uniform(k1, (fi, fo), jnp.float32, -b, b),
            jax.random.uniform(k2, (1, fo), jnp.float32, -b, b),
        )

    def gru(k, fi, h):
        k1, k2, k3, k4 = jax.random.split(k, 4)
        b = 1.0 / math.sqrt(h)
        return (
            jax.random.uniform(k1, (fi, 3 * h), jnp.float32, -b, b),   # W_ih
            jax.random.uniform(k2, (h, 3 * h), jnp.float32, -b, b),    # W_hh
            jax.random.uniform(k3, (1, 3 * h), jnp.float32, -b, b),    # b_ih
            jax.random.uniform(k4, (1, 3 * h), jnp.float32, -b, b),    # b_hh
        )

    W1re, b1re = lin(keys[0], 2 * L + 1, fc_dim)
    W1im, b1im = lin(keys[1], 2 * L + 1, fc_dim)
    a1 = jnp.full((1, 1), 0.25, jnp.float32)                           # PReLU init
    Wihr, Whhr, bihr, bhhr = gru(keys[2], fc_dim, rnn_dim)
    Wihi, Whhi, bihi, bhhi = gru(keys[3], fc_dim, rnn_dim)
    W2re, b2re = lin(keys[4], rnn_dim, fc_dim)
    W2im, b2im = lin(keys[5], rnn_dim, fc_dim)
    a2 = jnp.full((1, 1), 0.25, jnp.float32)
    W3re, b3re = lin(keys[6], fc_dim, L)
    W3im, b3im = lin(keys[7], fc_dim, L)

    return [
        W1re, W1im, b1re, b1im, a1,
        Wihr, Whhr, bihr, bhhr,
        Wihi, Whhi, bihi, bhhi,
        W2re, W2im, b2re, b2im, a2,
        W3re, W3im, b3re, b3im,
    ]


# ----------------------------------------------------------------------------
# Wrapper-side packing of the 22 module parameters into 6 feature-major slabs
# (transposed to (out, in), zero-padded to 8-multiple feature dims, biases
# folded as extra weight columns wherever they pair with a ones row).
# ----------------------------------------------------------------------------
def pack_params(params):
    (W1re, W1im, b1re, b1im, a1,
     Wihr, Whhr, bihr, bhhr,
     Wihi, Whhi, bihi, bhhi,
     W2re, W2im, b2re, b2im, a2,
     W3re, W3im, b3re, b3im) = params

    f32 = jnp.float32
    fc_dim = W1re.shape[1]
    rnn_dim = Whhr.shape[0]
    L = W3re.shape[1]
    Fp = _round_up(fc_dim, 8)
    Hp = _round_up(rnn_dim, 8)

    # fc_in slab: rows [re(Fp); im(Fp)], cols [W_xt(L) | W_dh(L) | W_e(1) | bias(1)]
    # (original torch input order was [xt(L), e(1), dh(L)]).
    def fcin_block(W, b):
        Wt = W.astype(f32).T                                   # (fc, 2L+1)
        Wx, We, Wd = Wt[:, :L], Wt[:, L:L + 1], Wt[:, L + 1:]
        blk = jnp.concatenate([Wx, Wd, We, b.astype(f32).T], axis=1)
        return jnp.pad(blk, ((0, Fp - fc_dim), (0, 0)))

    w1 = jnp.concatenate([fcin_block(W1re, b1re), fcin_block(W1im, b1im)], axis=0)

    # GRU slabs: rows = [gate r: gru_r, gru_i | gate z: ... | gate n: ...],
    # each block padded to Hp rows; biases folded as the trailing column.
    def padT(W, rows, cols):
        Wt = W.astype(f32).T
        return jnp.pad(Wt, ((0, rows - Wt.shape[0]), (0, cols - Wt.shape[1])))

    zHH = jnp.zeros((Hp, Hp), f32)
    wih_rows, whh_rows = [], []
    for g in range(3):                                          # gate order r, z, n
        sl = slice(g * rnn_dim, (g + 1) * rnn_dim)
        wih_rows.append(jnp.concatenate(
            [padT(Wihr[:, sl], Hp, Fp), padT(bihr[:, sl], Hp, 1)], axis=1))
        wih_rows.append(jnp.concatenate(
            [padT(Wihi[:, sl], Hp, Fp), padT(bihi[:, sl], Hp, 1)], axis=1))
        whh_rows.append(jnp.concatenate(
            [padT(Whhr[:, sl], Hp, Hp), zHH, padT(bhhr[:, sl], Hp, 1)], axis=1))
        whh_rows.append(jnp.concatenate(
            [zHH, padT(Whhi[:, sl], Hp, Hp), padT(bhhi[:, sl], Hp, 1)], axis=1))
    wih = jnp.concatenate(wih_rows, axis=0)                     # (6Hp, Fp+1)
    whh = jnp.concatenate(whh_rows, axis=0)                     # (6Hp, 2Hp+1)

    # fc_out slabs: [W^T (padded) | bias] per branch, re stacked over im.
    def fco_block(W, b, out_pad, in_pad):
        Wt = jnp.pad(W.astype(f32).T, ((0, 0), (0, in_pad - W.shape[0])))
        blk = jnp.concatenate([Wt, b.astype(f32).T], axis=1)
        return jnp.pad(blk, ((0, out_pad - blk.shape[0]), (0, 0)))

    w2 = jnp.concatenate(
        [fco_block(W2re, b2re, Fp, Hp), fco_block(W2im, b2im, Fp, Hp)], axis=0
    )                                                           # (2Fp, Hp+1)
    w3 = jnp.concatenate(
        [fco_block(W3re, b3re, L, Fp), fco_block(W3im, b3im, L, Fp)], axis=0
    )                                                           # (2L, Fp+1)
    alphas = jnp.concatenate([a1.reshape(1, 1), a2.reshape(1, 1)], axis=1).astype(f32)

    # TODO(synk): weights could be pre-cast to bf16 (native MXU dtype) once the
    # long sequential Kalman recursion is validated against a f32 reference.
    return (w1, wih, whh, w2, w3, alphas)


# ----------------------------------------------------------------------------
# Pallas kernel: time recursion for one (row block, time chunk) grid cell.
# ----------------------------------------------------------------------------
def _nkf_kernel(
    act_ref,                                    # (T_pad,) int32 scalar prefetch (SMEM)
    in_ref,                                     # (TC, 8, n): rows x_re,x_im,y_re,y_im,pad
    w1_ref, wih_ref, whh_ref, w2_ref, w3_ref, alph_ref,
    out_re_ref, out_im_ref,                     # (TC, n) each, lane/sublane dense
    xt_re_s, xt_im_s,                           # (L, n) rolling far-end window
    hpri_re_s, hpri_im_s, hpos_re_s, hpos_im_s, # (L, n) Kalman filter taps
    hs_s,                                       # (2Hp+1, 2n) fused GRU state (+ ones row)
):
    TC, _, n = in_ref.shape
    L = xt_re_s.shape[0]
    Hp1, n2 = hs_s.shape
    Hp2 = Hp1 - 1                               # 2 * Hp
    Hp = Hp2 // 2
    Fp = wih_ref.shape[1] - 1
    jchunk = pl.program_id(1)

    # Reset the carried recursion state at the first time chunk of a row block.
    @pl.when(jchunk == 0)
    def _():
        z0 = jnp.zeros((L, n), jnp.float32)
        xt_re_s[...] = z0
        xt_im_s[...] = z0
        hpri_re_s[...] = z0
        hpri_im_s[...] = z0
        hpos_re_s[...] = z0
        hpos_im_s[...] = z0
        hs_s[...] = jnp.concatenate(
            [jnp.zeros((Hp2, n2), jnp.float32), jnp.ones((1, n2), jnp.float32)],
            axis=0,
        )

    # ---- hoist all weights / broadcasts once per grid step (not per frame) ----
    W1 = w1_ref[...]                            # (2Fp, 2L+2)  re rows ; im rows
    WIH = wih_ref[...]                          # (6Hp, Fp+1)  b_ih folded (last col)
    WHH = whh_ref[...]                          # (6Hp, 2Hp+1) b_hh folded (last col)
    W2 = w2_ref[...]                            # (2Fp, Hp+1)  b2 folded (last col)
    W3s = w3_ref[...]                           # (2L, Fp+1)
    W3 = W3s[:, :Fp]
    b3 = W3s[:, Fp:]
    B3re = jnp.broadcast_to(b3[:L], (L, n))
    B3im = jnp.broadcast_to(b3[L:], (L, n))
    A = alph_ref[...]                           # (1, 2)
    A1 = jnp.broadcast_to(A[0:1, 0:1], (Fp, n2))
    A2 = jnp.broadcast_to(A[0:1, 1:2], (Fp, n2))
    ones_1n = jnp.ones((1, n), jnp.float32)
    ones_2n = jnp.ones((1, n2), jnp.float32)

    def prelu(v, alpha_b):
        return jnp.where(v >= 0.0, v, alpha_b * v)

    def mm(a, b):
        return jnp.dot(a, b, preferred_element_type=jnp.float32)

    def _frame(tt, carry):
        fr = in_ref[tt]                         # (8, n)
        x_re_new = fr[0:1, :]
        x_im_new = fr[1:2, :]
        y_re = fr[2:3, :]
        y_im = fr[3:4, :]

        # Advance the L-tap far-end window every frame (even for skipped frames),
        # exactly like torch rebuilds xt from x each iteration.
        xt_re = jnp.concatenate([xt_re_s[...][1:], x_re_new], axis=0)
        xt_im = jnp.concatenate([xt_im_s[...][1:], x_im_new], axis=0)
        xt_re_s[...] = xt_re
        xt_im_s[...] = xt_im

        active = act_ref[jchunk * TC + tt] != 0

        @pl.when(active)
        def _():
            # dh = h_posterior - h_prior ; h_prior <- h_posterior
            hp_re = hpos_re_s[...]
            hp_im = hpos_im_s[...]
            dh_re = hp_re - hpri_re_s[...]
            dh_im = hp_im - hpri_im_s[...]
            hpri_re_s[...] = hp_re
            hpri_im_s[...] = hp_im

            # e = y[:, t] - <xt, h_prior>   (complex, no conjugation)
            pred_re = jnp.sum(xt_re * hp_re - xt_im * hp_im, axis=0, keepdims=True)
            pred_im = jnp.sum(xt_re * hp_im + xt_im * hp_re, axis=0, keepdims=True)
            e_re = y_re - pred_re               # (1, n)
            e_im = y_im - pred_im

            # fc_in (ComplexDense + ComplexPReLU): ONE fused matmul.
            # rows [0:Fp]=re branch, [Fp:2Fp]=im branch; lanes [0:n]=re stream,
            # [n:2n]=im stream; e-column and bias folded via the ones row.
            act_re = jnp.concatenate([xt_re, dh_re, e_re, ones_1n], axis=0)
            act_im = jnp.concatenate([xt_im, dh_im, e_im, ones_1n], axis=0)
            act2 = jnp.concatenate([act_re, act_im], axis=1)     # (2L+2, 2n)
            res1 = mm(W1, act2)                                  # (2Fp, 2n)
            u2 = prelu(jnp.concatenate([res1[:Fp, :n], res1[Fp:, n:]], axis=1), A1)
            u2e = jnp.concatenate([u2, ones_2n], axis=0)         # (Fp+1, 2n)

            # ComplexGRU: 4 GRU cells fused into one batched cell (2 matmuls).
            hs_full = hs_s[...]                                  # (2Hp+1, 2n)
            gi = mm(WIH, u2e)                                    # (6Hp, 2n) incl. b_ih
            gh = mm(WHH, hs_full)                                # (6Hp, 2n) incl. b_hh
            rg = jax.nn.sigmoid(gi[:Hp2] + gh[:Hp2])
            zg = jax.nn.sigmoid(gi[Hp2:2 * Hp2] + gh[Hp2:2 * Hp2])
            cg = jnp.tanh(gi[2 * Hp2:] + rg * gh[2 * Hp2:])
            hs_old = hs_full[:Hp2]
            hs_new = (1.0 - zg) * cg + zg * hs_old               # (2Hp, 2n)
            hs_s[pl.ds(0, Hp2), :] = hs_new                      # ones row persists

            rnn_re = hs_new[:Hp, :n] - hs_new[Hp:, n:]           # Frr - Fii
            rnn_im = hs_new[Hp:, :n] + hs_new[:Hp, n:]           # Fri + Fir

            # fc_out: fused ComplexDense + ComplexPReLU + fused ComplexDense.
            rnn2 = jnp.concatenate(
                [jnp.concatenate([rnn_re, rnn_im], axis=1), ones_2n], axis=0)
            res2 = mm(W2, rnn2)                                  # (2Fp, 2n) incl. b2
            v2 = prelu(jnp.concatenate([res2[:Fp, :n], res2[Fp:, n:]], axis=1), A2)
            res3 = mm(W3, v2)                                    # (2L, 2n)
            kg_re = res3[:L, :n] + B3re                          # (L, n)
            kg_im = res3[L:, n:] + B3im

            # h_posterior = h_prior + kg * e
            hq_re = hp_re + (kg_re * e_re - kg_im * e_im)
            hq_im = hp_im + (kg_re * e_im + kg_im * e_re)
            hpos_re_s[...] = hq_re
            hpos_im_s[...] = hq_im

            # echo_hat[:, t] = <xt, h_posterior>
            echo_re = jnp.sum(xt_re * hq_re - xt_im * hq_im, axis=0, keepdims=True)
            echo_im = jnp.sum(xt_re * hq_im + xt_im * hq_re, axis=0, keepdims=True)
            out_re_ref[pl.ds(tt, 1), :] = echo_re
            out_im_ref[pl.ds(tt, 1), :] = echo_im

        @pl.when(jnp.logical_not(active))
        def _():
            zr = jnp.zeros((1, n), jnp.float32)
            out_re_ref[pl.ds(tt, 1), :] = zr
            out_im_ref[pl.ds(tt, 1), :] = zr

        return carry

    # Strictly serial recursion -> no unrolling (unroll buys no ILP here).
    lax.fori_loop(0, TC, _frame, 0)


# ----------------------------------------------------------------------------
# Wrapper: builds kernel-layout tensors, calls pallas_call, returns echo_hat.
# ----------------------------------------------------------------------------
def _default_block_n():
    # Generation-aware lane width: 384 on v7x (even 2-TensorCore split of the
    # 513-row spectrogram), 256 on v6e (fills the 256-wide MXU), 128 otherwise.
    try:
        kind = jax.devices()[0].device_kind.lower()
    except Exception:
        return 128
    if "v7" in kind:
        return 384
    if "v6" in kind:
        return 256
    return 128


def nkf_echo_pallas(x_spec, y_spec, params, L=L_DEFAULT, block_n=None, t_chunk=128):
    """x_spec, y_spec: (N=B*F, T) complex64 spectrograms -> echo_hat (N, T) complex."""
    N, T = x_spec.shape
    if block_n is None:
        block_n = _default_block_n()
    weights = pack_params(params)
    Hp2 = weights[2].shape[1] - 1              # gru_whh is (6Hp, 2Hp+1)

    TC = min(t_chunk, _round_up(T, 8))         # time-chunk (multiple of 8 or == T_pad)
    T_pad = _round_up(T, TC)
    N_pad = _round_up(N, block_n)

    # Per-frame active mask == torch's `xt.abs().mean() < 1e-5 -> continue`
    # (global mean over the whole (B*F, L) window, including the zero pad cols).
    row_sum = jnp.sum(jnp.abs(x_spec), axis=0)                        # (T,)
    row_sum = jnp.concatenate([jnp.zeros((L - 1,), row_sum.dtype), row_sum])
    win_sum = jnp.sum(
        row_sum[jnp.arange(T)[:, None] + jnp.arange(L)[None, :]], axis=1)
    active = (win_sum / (N * L) >= 1e-5).astype(jnp.int32)
    active = jnp.pad(active, (0, T_pad - T))

    # Single dense input slab (T_pad, 8, N_pad): x_re, x_im, y_re, y_im + pad rows.
    def to_tn(z):
        zt = jnp.swapaxes(z, 0, 1).astype(jnp.float32)                # (T, N)
        return jnp.pad(zt, ((0, T_pad - T), (0, N_pad - N)))

    slab = jnp.stack(
        [to_tn(jnp.real(x_spec)), to_tn(jnp.imag(x_spec)),
         to_tn(jnp.real(y_spec)), to_tn(jnp.imag(y_spec))], axis=1)   # (T_pad, 4, N_pad)
    slab = jnp.pad(slab, ((0, 0), (0, 4), (0, 0)))                    # (T_pad, 8, N_pad)

    grid_spec = pltpu.PrefetchScalarGridSpec(
        num_scalar_prefetch=1,
        grid=(N_pad // block_n, T_pad // TC),
        in_specs=[pl.BlockSpec((TC, 8, block_n), lambda i, j, act: (j, 0, i))]
        + [pl.BlockSpec(w.shape, lambda i, j, act: (0, 0)) for w in weights],
        out_specs=[pl.BlockSpec((TC, block_n), lambda i, j, act: (j, i)),
                   pl.BlockSpec((TC, block_n), lambda i, j, act: (j, i))],
        scratch_shapes=[pltpu.VMEM((L, block_n), jnp.float32)] * 6
        + [pltpu.VMEM((Hp2 + 1, 2 * block_n), jnp.float32)],
    )

    out_re, out_im = pl.pallas_call(
        _nkf_kernel,
        out_shape=(jax.ShapeDtypeStruct((T_pad, N_pad), jnp.float32),
                   jax.ShapeDtypeStruct((T_pad, N_pad), jnp.float32)),
        grid_spec=grid_spec,
        compiler_params=pltpu.CompilerParams(
            dimension_semantics=("parallel", "arbitrary"),
            vmem_limit_bytes=32 * 1024 * 1024,
        ),
    )(active, slab, *weights)

    echo = out_re[:T, :N] + 1j * out_im[:T, :N]                       # (T, N)
    return jnp.swapaxes(echo, 0, 1)                                   # (N, T) complex


def nkf_forward(x, y, params, L=L_DEFAULT, n_fft=N_FFT, hop=HOP):
    # TODO(synk): like the torch module, istft on (B*F, T) only makes sense for
    # a single (1-D) waveform, i.e. B == 1 so B*F == n_fft//2 + 1.
    X = _stft(x, n_fft, hop)        # (F, T) complex64
    Y = _stft(y, n_fft, hop)
    echo_hat = nkf_echo_pallas(X, Y, params, L=L)
    return _istft(Y - echo_hat, n_fft, hop)


if __name__ == "__main__":
    key = jax.random.PRNGKey(0)
    kx, ky, kw = jax.random.split(key, 3)

    n_samples = 2048                                     # -> T = 1 + 2048//256 = 9 frames
    x = 0.05 * jax.random.normal(kx, (n_samples,), dtype=jnp.float32)            # far-end
    y = 0.3 * x + 0.02 * jax.random.normal(ky, (n_samples,), dtype=jnp.float32)  # mic

    params = init_params(kw, L=L_DEFAULT, fc_dim=FC_DIM, rnn_dim=RNN_DIM)

    s_hat = jax.jit(nkf_forward)(x, y, params)
    s_hat = jax.block_until_ready(s_hat)

    expected_T = 1 + n_samples // HOP
    assert s_hat.shape == (HOP * (expected_T - 1),), s_hat.shape
    assert bool(jnp.all(jnp.isfinite(s_hat)))
    print("KERNEL_OK")
</pallas_src>

<mosaic_0001>
module attributes {stable_mosaic.version = 11 : i64} {
  func.func private @main(%arg0: i32) attributes {dimension_semantics = [#tpu.dimension_semantics<core_parallel>], iteration_bounds = array<i64: 2>, tpu.core_type = #tpu.core_type<sc_scalar_subcore>, window_params = []} {
    return
  }
}

module attributes {stable_mosaic.version = 11 : i64} {
  func.func private @main(%arg0: i32) attributes {dimension_semantics = [#tpu.dimension_semantics<core_parallel>], iteration_bounds = array<i64: 2>, tpu.core_type = #tpu.core_type<sc_scalar_subcore>, window_params = []} {
    return
  }
}

module attributes {stable_mosaic.version = 11 : i64} {
  func.func @_nkf_kernel(%arg0: i32, %arg1: i32, %arg2: memref<16xi32, #tpu.memory_space<smem>>, %arg3: memref<16x8x128xf32, #tpu.memory_space<vmem>>, %arg4: memref<48x10xf32, #tpu.memory_space<vmem>>, %arg5: memref<144x25xf32, #tpu.memory_space<vmem>>, %arg6: memref<144x49xf32, #tpu.memory_space<vmem>>, %arg7: memref<48x25xf32, #tpu.memory_space<vmem>>, %arg8: memref<8x25xf32, #tpu.memory_space<vmem>>, %arg9: memref<1x2xf32, #tpu.memory_space<vmem>>, %arg10: memref<16x128xf32, #tpu.memory_space<vmem>>, %arg11: memref<16x128xf32, #tpu.memory_space<vmem>>, %arg12: memref<4x128xf32, #tpu.memory_space<vmem>>, %arg13: memref<4x128xf32, #tpu.memory_space<vmem>>, %arg14: memref<4x128xf32, #tpu.memory_space<vmem>>, %arg15: memref<4x128xf32, #tpu.memory_space<vmem>>, %arg16: memref<4x128xf32, #tpu.memory_space<vmem>>, %arg17: memref<4x128xf32, #tpu.memory_space<vmem>>, %arg18: memref<49x256xf32, #tpu.memory_space<vmem>>) attributes {dimension_semantics = [#tpu.dimension_semantics<parallel>, #tpu.dimension_semantics<arbitrary>], iteration_bounds = array<i64: 5, 1>, scalar_prefetch = 1 : i64, scratch_operands = 7 : i64, tpu.core_type = #tpu.core_type<tc>, window_params = [{transform_indices = @transform_0, window_bounds = array<i64: 16, 8, 128>}, {pipeline_mode = #tpu.pipeline_mode<synchronous>, transform_indices = @transform_1, window_bounds = array<i64: 48, 10>}, {pipeline_mode = #tpu.pipeline_mode<synchronous>, transform_indices = @transform_2, window_bounds = array<i64: 144, 25>}, {pipeline_mode = #tpu.pipeline_mode<synchronous>, transform_indices = @transform_3, window_bounds = array<i64: 144, 49>}, {pipeline_mode = #tpu.pipeline_mode<synchronous>, transform_indices = @transform_4, window_bounds = array<i64: 48, 25>}, {pipeline_mode = #tpu.pipeline_mode<synchronous>, transform_indices = @transform_5, window_bounds = array<i64: 8, 25>}, {pipeline_mode = #tpu.pipeline_mode<synchronous>, transform_indices = @transform_6, window_bounds = array<i64: 1, 2>}, {transform_indices = @transform_7, window_bounds = array<i64: 16, 128>}, {transform_indices = @transform_8, window_bounds = array<i64: 16, 128>}]} {
    %c0_i32 = arith.constant 0 : i32
    %0 = arith.cmpi eq, %arg1, %c0_i32 : i32
    %1 = arith.extui %0 : i1 to i32
    %c0_i32_0 = arith.constant 0 : i32
    %2 = arith.cmpi ne, %1, %c0_i32_0 : i32
    scf.if %2 {
      %cst_15 = arith.constant 0.000000e+00 : f32
      %26 = vector.broadcast %cst_15 : f32 to vector<4x128xf32>
      %c0_16 = arith.constant 0 : index
      %c0_17 = arith.constant 0 : index
      %27 = vector.load %arg12[%c0_16, %c0_17] : memref<4x128xf32, #tpu.memory_space<vmem>>, vector<4x128xf32>
      tpu.vector_store %arg12[%c0_16, %c0_17], %26 {strides = array<i32>} : memref<4x128xf32, #tpu.memory_space<vmem>>, vector<4x128xf32>,
      %c0_18 = arith.constant 0 : index
      %c0_19 = arith.constant 0 : index
      %28 = vector.load %arg13[%c0_18, %c0_19] : memref<4x128xf32, #tpu.memory_space<vmem>>, vector<4x128xf32>
      tpu.vector_store %arg13[%c0_18, %c0_19], %26 {strides = array<i32>} : memref<4x128xf32, #tpu.memory_space<vmem>>, vector<4x128xf32>,
      %c0_20 = arith.constant 0 : index
      %c0_21 = arith.constant 0 : index
      %29 = vector.load %arg14[%c0_20, %c0_21] : memref<4x128xf32, #tpu.memory_space<vmem>>, vector<4x128xf32>
      tpu.vector_store %arg14[%c0_20, %c0_21], %26 {strides = array<i32>} : memref<4x128xf32, #tpu.memory_space<vmem>>, vector<4x128xf32>,
      %c0_22 = arith.constant 0 : index
      %c0_23 = arith.constant 0 : index
      %30 = vector.load %arg15[%c0_22, %c0_23] : memref<4x128xf32, #tpu.memory_space<vmem>>, vector<4x128xf32>
      tpu.vector_store %arg15[%c0_22, %c0_23], %26 {strides = array<i32>} : memref<4x128xf32, #tpu.memory_space<vmem>>, vector<4x128xf32>,
      %c0_24 = arith.constant 0 : index
      %c0_25 = arith.constant 0 : index
      %31 = vector.load %arg16[%c0_24, %c0_25] : memref<4x128xf32, #tpu.memory_space<vmem>>, vector<4x128xf32>
      tpu.vector_store %arg16[%c0_24, %c0_25], %26 {strides = array<i32>} : memref<4x128xf32, #tpu.memory_space<vmem>>, vector<4x128xf32>,
      %c0_26 = arith.constant 0 : index
      %c0_27 = arith.constant 0 : index
      %32 = vector.load %arg17[%c0_26, %c0_27] : memref<4x128xf32, #tpu.memory_space<vmem>>, vector<4x128xf32>
      tpu.vector_store %arg17[%c0_26, %c0_27], %26 {strides = array<i32>} : memref<4x128xf32, #tpu.memory_space<vmem>>, vector<4x128xf32>,
      %cst_28 = arith.constant 0.000000e+00 : f32
      %33 = vector.broadcast %cst_28 : f32 to vector<48x256xf32>
      %cst_29 = arith.constant 1.000000e+00 : f32
      %34 = vector.broadcast %cst_29 : f32 to vector<1x256xf32>
      %35 = tpu.concatenate %33, %34 in 0 : vector<48x256xf32>, vector<1x256xf32> -> vector<49x256xf32>
      %c0_30 = arith.constant 0 : index
      %c0_31 = arith.constant 0 : index
      %36 = vector.load %arg18[%c0_30, %c0_31] : memref<49x256xf32, #tpu.memory_space<vmem>>, vector<49x256xf32>
      tpu.vector_store %arg18[%c0_30, %c0_31], %35 {strides = array<i32>} : memref<49x256xf32, #tpu.memory_space<vmem>>, vector<49x256xf32>,
    } else {
    }
    %c0 = arith.constant 0 : index
    %c0_1 = arith.constant 0 : index
    %3 = vector.load %arg4[%c0, %c0_1] : memref<48x10xf32, #tpu.memory_space<vmem>>, vector<48x10xf32>
    %c0_2 = arith.constant 0 : index
    %c0_3 = arith.constant 0 : index
    %4 = vector.load %arg5[%c0_2, %c0_3] : memref<144x25xf32, #tpu.memory_space<vmem>>, vector<144x25xf32>
    %c0_4 = arith.constant 0 : index
    %c0_5 = arith.constant 0 : index
    %5 = vector.load %arg6[%c0_4, %c0_5] : memref<144x49xf32, #tpu.memory_space<vmem>>, vector<144x49xf32>
    %c0_6 = arith.constant 0 : index
    %c0_7 = arith.constant 0 : index
    %6 = vector.load %arg7[%c0_6, %c0_7] : memref<48x25xf32, #tpu.memory_space<vmem>>, vector<48x25xf32>
    %c0_8 = arith.constant 0 : index
    %c0_9 = arith.constant 0 : index
    %7 = vector.load %arg8[%c0_8, %c0_9] : memref<8x25xf32, #tpu.memory_space<vmem>>, vector<8x25xf32>
    %8 = vector.extract_strided_slice %7 {offsets = [0, 0], sizes = [8, 24], strides = [1, 1]} : vector<8x25xf32> to vector<8x24xf32>
    %9 = vector.extract_strided_slice %7 {offsets = [0, 24], sizes = [8, 1], strides = [1, 1]} : vector<8x25xf32> to vector<8x1xf32>
    %10 = vector.extract_strided_slice %9 {offsets = [0, 0], sizes = [4, 1], strides = [1, 1]} : vector<8x1xf32> to vector<4x1xf32>
    %11 = vector.shape_cast %10 : vector<4x1xf32> to vector<4x1xf32>
    %12 = vector.broadcast %11 : vector<4x1xf32> to vector<4x128xf32>
    %13 = vector.extract_strided_slice %9 {offsets = [4, 0], sizes = [4, 1], strides = [1, 1]} : vector<8x1xf32> to vector<4x1xf32>
    %14 = vector.shape_cast %13 : vector<4x1xf32> to vector<4x1xf32>
    %15 = vector.broadcast %14 : vector<4x1xf32> to vector<4x128xf32>
    %c0_10 = arith.constant 0 : index
    %c0_11 = arith.constant 0 : index
    %16 = vector.load %arg9[%c0_10, %c0_11] : memref<1x2xf32, #tpu.memory_space<vmem>>, vector<1x2xf32>
    %17 = vector.extract_strided_slice %16 {offsets = [0, 0], sizes = [1, 1], strides = [1, 1]} : vector<1x2xf32> to vector<1x1xf32>
    %18 = vector.shape_cast %17 : vector<1x1xf32> to vector<1x1xf32>
    %19 = vector.broadcast %18 : vector<1x1xf32> to vector<24x256xf32>
    %20 = vector.extract_strided_slice %16 {offsets = [0, 1], sizes = [1, 1], strides = [1, 1]} : vector<1x2xf32> to vector<1x1xf32>
    %21 = vector.shape_cast %20 : vector<1x1xf32> to vector<1x1xf32>
    %22 = vector.broadcast %21 : vector<1x1xf32> to vector<24x256xf32>
    %cst = arith.constant 1.000000e+00 : f32
    %23 = vector.broadcast %cst : f32 to vector<1x128xf32>
    %cst_12 = arith.constant 1.000000e+00 : f32
    %24 = vector.broadcast %cst_12 : f32 to vector<1x256xf32>
    %c0_i32_13 = arith.constant 0 : i32
    %c16_i32 = arith.constant 16 : i32
    %25 = arith.addi %c0_i32_13, %c16_i32 : i32
    %c1_i32 = arith.constant 1 : i32
    scf.for %arg19 = %c0_i32_13 to %25 step %c1_i32  : i32 {
      %26 = arith.index_cast %arg19 : i32 to index
      %c0_15 = arith.constant 0 : index
      %c0_16 = arith.constant 0 : index
      %27 = vector.load %arg3[%26, %c0_15, %c0_16] : memref<16x8x128xf32, #tpu.memory_space<vmem>>, vector<1x8x128xf32>
      %28 = vector.shape_cast %27 : vector<1x8x128xf32> to vector<8x128xf32>
      %29 = vector.extract_strided_slice %28 {offsets = [0, 0], sizes = [1, 128], strides = [1, 1]} : vector<8x128xf32> to vector<1x128xf32>
      %30 = vector.extract_strided_slice %28 {offsets = [1, 0], sizes = [1, 128], strides = [1, 1]} : vector<8x128xf32> to vector<1x128xf32>
      %31 = vector.extract_strided_slice %28 {offsets = [2, 0], sizes = [1, 128], strides = [1, 1]} : vector<8x128xf32> to vector<1x128xf32>
      %32 = vector.extract_strided_slice %28 {offsets = [3, 0], sizes = [1, 128], strides = [1, 1]} : vector<8x128xf32> to vector<1x128xf32>
      %c0_17 = arith.constant 0 : index
      %c0_18 = arith.constant 0 : index
      %33 = vector.load %arg12[%c0_17, %c0_18] : memref<4x128xf32, #tpu.memory_space<vmem>>, vector<4x128xf32>
      %34 = vector.extract_strided_slice %33 {offsets = [1, 0], sizes = [3, 128], strides = [1, 1]} : vector<4x128xf32> to vector<3x128xf32>
      %35 = tpu.concatenate %34, %29 in 0 : vector<3x128xf32>, vector<1x128xf32> -> vector<4x128xf32>
      %c0_19 = arith.constant 0 : index
      %c0_20 = arith.constant 0 : index
      %36 = vector.load %arg13[%c0_19, %c0_20] : memref<4x128xf32, #tpu.memory_space<vmem>>, vector<4x128xf32>
      %37 = vector.extract_strided_slice %36 {offsets = [1, 0], sizes = [3, 128], strides = [1, 1]} : vector<4x128xf32> to vector<3x128xf32>
      %38 = tpu.concatenate %37, %30 in 0 : vector<3x128xf32>, vector<1x128xf32> -> vector<4x128xf32>
      %c0_21 = arith.constant 0 : index
      %c0_22 = arith.constant 0 : index
      %39 = vector.load %arg12[%c0_21, %c0_22] : memref<4x128xf32, #tpu.memory_space<vmem>>, vector<4x128xf32>
      tpu.vector_store %arg12[%c0_21, %c0_22], %35 {strides = array<i32>} : memref<4x128xf32, #tpu.memory_space<vmem>>, vector<4x128xf32>,
      %c0_23 = arith.constant 0 : index
      %c0_24 = arith.constant 0 : index
      %40 = vector.load %arg13[%c0_23, %c0_24] : memref<4x128xf32, #tpu.memory_space<vmem>>, vector<4x128xf32>
      tpu.vector_store %arg13[%c0_23, %c0_24], %38 {strides = array<i32>} : memref<4x128xf32, #tpu.memory_space<vmem>>, vector<4x128xf32>,
      %c16_i32_25 = arith.constant 16 : i32
      %41 = arith.muli %arg1, %c16_i32_25 : i32
      %42 = arith.addi %41, %arg19 : i32
      %43 = arith.index_cast %42 : i32 to index
      %44 = memref.load %arg2[%43] : memref<16xi32, #tpu.memory_space<smem>>
      %c0_i32_26 = arith.constant 0 : i32
      %45 = arith.cmpi ne, %44, %c0_i32_26 : i32
      %46 = arith.extui %45 : i1 to i32
      %c0_i32_27 = arith.constant 0 : i32
      %47 = arith.cmpi ne, %46, %c0_i32_27 : i32
      scf.if %47 {
        %c0_29 = arith.constant 0 : index
        %c0_30 = arith.constant 0 : index
        %51 = vector.load %arg16[%c0_29, %c0_30] : memref<4x128xf32, #tpu.memory_space<vmem>>, vector<4x128xf32>
        %c0_31 = arith.constant 0 : index
        %c0_32 = arith.constant 0 : index
        %52 = vector.load %arg17[%c0_31, %c0_32] : memref<4x128xf32, #tpu.memory_space<vmem>>, vector<4x128xf32>
        %c0_33 = arith.constant 0 : index
        %c0_34 = arith.constant 0 : index
        %53 = vector.load %arg14[%c0_33, %c0_34] : memref<4x128xf32, #tpu.memory_space<vmem>>, vector<4x128xf32>
        %54 = arith.subf %51, %53 : vector<4x128xf32>
        %c0_35 = arith.constant 0 : index
        %c0_36 = arith.constant 0 : index
        %55 = vector.load %arg15[%c0_35, %c0_36] : memref<4x128xf32, #tpu.memory_space<vmem>>, vector<4x128xf32>
        %56 = arith.subf %52, %55 : vector<4x128xf32>
        %c0_37 = arith.constant 0 : index
        %c0_38 = arith.constant 0 : index
        %57 = vector.load %arg14[%c0_37, %c0_38] : memref<4x128xf32, #tpu.memory_space<vmem>>, vector<4x128xf32>
        tpu.vector_store %arg14[%c0_37, %c0_38], %51 {strides = array<i32>} : memref<4x128xf32, #tpu.memory_space<vmem>>, vector<4x128xf32>,
        %c0_39 = arith.constant 0 : index
        %c0_40 = arith.constant 0 : index
        %58 = vector.load %arg15[%c0_39, %c0_40] : memref<4x128xf32, #tpu.memory_space<vmem>>, vector<4x128xf32>
        tpu.vector_store %arg15[%c0_39, %c0_40], %52 {strides = array<i32>} : memref<4x128xf32, #tpu.memory_space<vmem>>, vector<4x128xf32>,
        %59 = arith.mulf %35, %51 : vector<4x128xf32>
        %60 = arith.mulf %38, %52 : vector<4x128xf32>
        %61 = arith.subf %59, %60 : vector<4x128xf32>
        %cst_41 = arith.constant dense<0.000000e+00> : vector<128xf32>
        %62 = vector.multi_reduction <add>, %61, %cst_41 [0] : vector<4x128xf32> to vector<128xf32>
        %63 = vector.shape_cast %62 : vector<128xf32> to vector<1x128xf32>
        %64 = arith.mulf %35, %52 : vector<4x128xf32>
        %65 = arith.mulf %38, %51 : vector<4x128xf32>
        %66 = arith.addf %64, %65 : vector<4x128xf32>
        %cst_42 = arith.constant dense<0.000000e+00> : vector<128xf32>
        %67 = vector.multi_reduction <add>, %66, %cst_42 [0] : vector<4x128xf32> to vector<128xf32>
        %68 = vector.shape_cast %67 : vector<128xf32> to vector<1x128xf32>
        %69 = arith.subf %31, %63 : vector<1x128xf32>
        %70 = arith.subf %32, %68 : vector<1x128xf32>
        %71 = tpu.concatenate %35, %54, %69, %23 in 0 : vector<4x128xf32>, vector<4x128xf32>, vector<1x128xf32>, vector<1x128xf32> -> vector<10x128xf32>
        %72 = tpu.concatenate %38, %56, %70, %23 in 0 : vector<4x128xf32>, vector<4x128xf32>, vector<1x128xf32>, vector<1x128xf32> -> vector<10x128xf32>
        %73 = tpu.concatenate %71, %72 in 1 : vector<10x128xf32>, vector<10x128xf32> -> vector<10x256xf32>
        %cst_43 = arith.constant dense<0.000000e+00> : vector<48x256xf32>
        %74 = tpu.matmul %3, %73, %cst_43 {dimension_numbers = #tpu.dot_dimension_numbers<[1], [0], [0], [1], [0, 0, 1, 1], [], []>} : vector<48x10xf32>, vector<10x256xf32>, vector<48x256xf32> -> vector<48x256xf32>
        %75 = vector.extract_strided_slice %74 {offsets = [0, 0], sizes = [24, 128], strides = [1, 1]} : vector<48x256xf32> to vector<24x128xf32>
        %76 = vector.extract_strided_slice %74 {offsets = [24, 128], sizes = [24, 128], strides = [1, 1]} : vector<48x256xf32> to vector<24x128xf32>
        %77 = tpu.concatenate %75, %76 in 1 : vector<24x128xf32>, vector<24x128xf32> -> vector<24x256xf32>
        %cst_44 = arith.constant 0.000000e+00 : f32
        %78 = vector.broadcast %cst_44 : f32 to vector<24x256xf32>
        %79 = arith.cmpf oge, %77, %78 : vector<24x256xf32>
        %80 = arith.mulf %19, %77 : vector<24x256xf32>
        %81 = arith.select %79, %77, %80 : vector<24x256xi1>, vector<24x256xf32>
        %82 = tpu.concatenate %81, %24 in 0 : vector<24x256xf32>, vector<1x256xf32> -> vector<25x256xf32>
        %c0_45 = arith.constant 0 : index
        %c0_46 = arith.constant 0 : index
        %83 = vector.load %arg18[%c0_45, %c0_46] : memref<49x256xf32, #tpu.memory_space<vmem>>, vector<49x256xf32>
        %cst_47 = arith.constant dense<0.000000e+00> : vector<144x256xf32>
        %84 = tpu.matmul %4, %82, %cst_47 {dimension_numbers = #tpu.dot_dimension_numbers<[1], [0], [0], [1], [0, 0, 1, 1], [], []>} : vector<144x25xf32>, vector<25x256xf32>, vector<144x256xf32> -> vector<144x256xf32>
        %cst_48 = arith.constant dense<0.000000e+00> : vector<144x256xf32>
        %85 = tpu.matmul %5, %83, %cst_48 {dimension_numbers = #tpu.dot_dimension_numbers<[1], [0], [0], [1], [0, 0, 1, 1], [], []>} : vector<144x49xf32>, vector<49x256xf32>, vector<144x256xf32> -> vector<144x256xf32>
        %86 = vector.extract_strided_slice %84 {offsets = [0, 0], sizes = [48, 256], strides = [1, 1]} : vector<144x256xf32> to vector<48x256xf32>
        %87 = vector.extract_strided_slice %85 {offsets = [0, 0], sizes = [48, 256], strides = [1, 1]} : vector<144x256xf32> to vector<48x256xf32>
        %88 = arith.addf %86, %87 : vector<48x256xf32>
        %89 = arith.negf %88 : vector<48x256xf32>
        %90 = math.exp %89 : vector<48x256xf32>
        %cst_49 = arith.constant 1.000000e+00 : f32
        %91 = vector.broadcast %cst_49 : f32 to vector<48x256xf32>
        %92 = arith.addf %91, %90 : vector<48x256xf32>
        %93 = arith.divf %91, %92 : vector<48x256xf32>
        %94 = vector.extract_strided_slice %84 {offsets = [48, 0], sizes = [48, 256], strides = [1, 1]} : vector<144x256xf32> to vector<48x256xf32>
        %95 = vector.extract_strided_slice %85 {offsets = [48, 0], sizes = [48, 256], strides = [1, 1]} : vector<144x256xf32> to vector<48x256xf32>
        %96 = arith.addf %94, %95 : vector<48x256xf32>
        %97 = arith.negf %96 : vector<48x256xf32>
        %98 = math.exp %97 : vector<48x256xf32>
        %cst_50 = arith.constant 1.000000e+00 : f32
        %99 = vector.broadcast %cst_50 : f32 to vector<48x256xf32>
        %100 = arith.addf %99, %98 : vector<48x256xf32>
        %101 = arith.divf %99, %100 : vector<48x256xf32>
        %102 = vector.extract_strided_slice %84 {offsets = [96, 0], sizes = [48, 256], strides = [1, 1]} : vector<144x256xf32> to vector<48x256xf32>
        %103 = vector.extract_strided_slice %85 {offsets = [96, 0], sizes = [48, 256], strides = [1, 1]} : vector<144x256xf32> to vector<48x256xf32>
        %104 = arith.mulf %93, %103 : vector<48x256xf32>
        %105 = arith.addf %102, %104 : vector<48x256xf32>
        %106 = math.tanh %105 : vector<48x256xf32>
        %107 = vector.extract_strided_slice %83 {offsets = [0, 0], sizes = [48, 256], strides = [1, 1]} : vector<49x256xf32> to vector<48x256xf32>
        %cst_51 = arith.constant 1.000000e+00 : f32
        %108 = vector.broadcast %cst_51 : f32 to vector<48x256xf32>
        %109 = arith.subf %108, %101 : vector<48x256xf32>
        %110 = arith.mulf %109, %106 : vector<48x256xf32>
        %111 = arith.mulf %101, %107 : vector<48x256xf32>
        %112 = arith.addf %110, %111 : vector<48x256xf32>
        %c0_52 = arith.constant 0 : index
        %c0_53 = arith.constant 0 : index
        %113 = vector.load %arg18[%c0_52, %c0_53] : memref<49x256xf32, #tpu.memory_space<vmem>>, vector<48x256xf32>
        tpu.vector_store %arg18[%c0_52, %c0_53], %112 {strides = array<i32>} : memref<49x256xf32, #tpu.memory_space<vmem>>, vector<48x256xf32>,
        %114 = vector.extract_strided_slice %112 {offsets = [0, 0], sizes = [24, 128], strides = [1, 1]} : vector<48x256xf32> to vector<24x128xf32>
        %115 = vector.extract_strided_slice %112 {offsets = [24, 128], sizes = [24, 128], strides = [1, 1]} : vector<48x256xf32> to vector<24x128xf32>
        %116 = arith.subf %114, %115 : vector<24x128xf32>
        %117 = vector.extract_strided_slice %112 {offsets = [24, 0], sizes = [24, 128], strides = [1, 1]} : vector<48x256xf32> to vector<24x128xf32>
        %118 = vector.extract_strided_slice %112 {offsets = [0, 128], sizes = [24, 128], strides = [1, 1]} : vector<48x256xf32> to vector<24x128xf32>
        %119 = arith.addf %117, %118 : vector<24x128xf32>
        %120 = tpu.concatenate %116, %119 in 1 : vector<24x128xf32>, vector<24x128xf32> -> vector<24x256xf32>
        %121 = tpu.concatenate %120, %24 in 0 : vector<24x256xf32>, vector<1x256xf32> -> vector<25x256xf32>
        %cst_54 = arith.constant dense<0.000000e+00> : vector<48x256xf32>
        %122 = tpu.matmul %6, %121, %cst_54 {dimension_numbers = #tpu.dot_dimension_numbers<[1], [0], [0], [1], [0, 0, 1, 1], [], []>} : vector<48x25xf32>, vector<25x256xf32>, vector<48x256xf32> -> vector<48x256xf32>
        %123 = vector.extract_strided_slice %122 {offsets = [0, 0], sizes = [24, 128], strides = [1, 1]} : vector<48x256xf32> to vector<24x128xf32>
        %124 = vector.extract_strided_slice %122 {offsets = [24, 128], sizes = [24, 128], strides = [1, 1]} : vector<48x256xf32> to vector<24x128xf32>
        %125 = tpu.concatenate %123, %124 in 1 : vector<24x128xf32>, vector<24x128xf32> -> vector<24x256xf32>
        %cst_55 = arith.constant 0.000000e+00 : f32
        %126 = vector.broadcast %cst_55 : f32 to vector<24x256xf32>
        %127 = arith.cmpf oge, %125, %126 : vector<24x256xf32>
        %128 = arith.mulf %22, %125 : vector<24x256xf32>
        %129 = arith.select %127, %125, %128 : vector<24x256xi1>, vector<24x256xf32>
        %cst_56 = arith.constant dense<0.000000e+00> : vector<8x256xf32>
        %130 = tpu.matmul %8, %129, %cst_56 {dimension_numbers = #tpu.dot_dimension_numbers<[1], [0], [0], [1], [0, 0, 1, 1], [], []>} : vector<8x24xf32>, vector<24x256xf32>, vector<8x256xf32> -> vector<8x256xf32>
        %131 = vector.extract_strided_slice %130 {offsets = [0, 0], sizes = [4, 128], strides = [1, 1]} : vector<8x256xf32> to vector<4x128xf32>
        %132 = arith.addf %131, %12 : vector<4x128xf32>
        %133 = vector.extract_strided_slice %130 {offsets = [4, 128], sizes = [4, 128], strides = [1, 1]} : vector<8x256xf32> to vector<4x128xf32>
        %134 = arith.addf %133, %15 : vector<4x128xf32>
        %135 = vector.broadcast %69 : vector<1x128xf32> to vector<4x128xf32>
        %136 = arith.mulf %132, %135 : vector<4x128xf32>
        %137 = vector.broadcast %70 : vector<1x128xf32> to vector<4x128xf32>
        %138 = arith.mulf %134, %137 : vector<4x128xf32>
        %139 = arith.subf %136, %138 : vector<4x128xf32>
        %140 = arith.addf %51, %139 : vector<4x128xf32>
        %141 = vector.broadcast %70 : vector<1x128xf32> to vector<4x128xf32>
        %142 = arith.mulf %132, %141 : vector<4x128xf32>
        %143 = vector.broadcast %69 : vector<1x128xf32> to vector<4x128xf32>
        %144 = arith.mulf %134, %143 : vector<4x128xf32>
        %145 = arith.addf %142, %144 : vector<4x128xf32>
        %146 = arith.addf %52, %145 : vector<4x128xf32>
        %c0_57 = arith.constant 0 : index
        %c0_58 = arith.constant 0 : index
        %147 = vector.load %arg16[%c0_57, %c0_58] : memref<4x128xf32, #tpu.memory_space<vmem>>, vector<4x128xf32>
        tpu.vector_store %arg16[%c0_57, %c0_58], %140 {strides = array<i32>} : memref<4x128xf32, #tpu.memory_space<vmem>>, vector<4x128xf32>,
        %c0_59 = arith.constant 0 : index
        %c0_60 = arith.constant 0 : index
        %148 = vector.load %arg17[%c0_59, %c0_60] : memref<4x128xf32, #tpu.memory_space<vmem>>, vector<4x128xf32>
        tpu.vector_store %arg17[%c0_59, %c0_60], %146 {strides = array<i32>} : memref<4x128xf32, #tpu.memory_space<vmem>>, vector<4x128xf32>,
        %149 = arith.mulf %35, %140 : vector<4x128xf32>
        %150 = arith.mulf %38, %146 : vector<4x128xf32>
        %151 = arith.subf %149, %150 : vector<4x128xf32>
        %cst_61 = arith.constant dense<0.000000e+00> : vector<128xf32>
        %152 = vector.multi_reduction <add>, %151, %cst_61 [0] : vector<4x128xf32> to vector<128xf32>
        %153 = vector.shape_cast %152 : vector<128xf32> to vector<1x128xf32>
        %154 = arith.mulf %35, %146 : vector<4x128xf32>
        %155 = arith.mulf %38, %140 : vector<4x128xf32>
        %156 = arith.addf %154, %155 : vector<4x128xf32>
        %cst_62 = arith.constant dense<0.000000e+00> : vector<128xf32>
        %157 = vector.multi_reduction <add>, %156, %cst_62 [0] : vector<4x128xf32> to vector<128xf32>
        %158 = vector.shape_cast %157 : vector<128xf32> to vector<1x128xf32>
        %159 = arith.index_cast %arg19 : i32 to index
        %c0_63 = arith.constant 0 : index
        %160 = vector.load %arg10[%159, %c0_63] : memref<16x128xf32, #tpu.memory_space<vmem>>, vector<1x128xf32>
        tpu.vector_store %arg10[%159, %c0_63], %153 {strides = array<i32>} : memref<16x128xf32, #tpu.memory_space<vmem>>, vector<1x128xf32>,
        %161 = arith.index_cast %arg19 : i32 to index
        %c0_64 = arith.constant 0 : index
        %162 = vector.load %arg11[%161, %c0_64] : memref<16x128xf32, #tpu.memory_space<vmem>>, vector<1x128xf32>
        tpu.vector_store %arg11[%161, %c0_64], %158 {strides = array<i32>} : memref<16x128xf32, #tpu.memory_space<vmem>>, vector<1x128xf32>,
      } else {
      }
      %true = arith.constant true
      %48 = arith.xori %45, %true : i1
      %49 = arith.extui %48 : i1 to i32
      %c0_i32_28 = arith.constant 0 : i32
      %50 = arith.cmpi ne, %49, %c0_i32_28 : i32
      scf.if %50 {
        %cst_29 = arith.constant 0.000000e+00 : f32
        %51 = vector.broadcast %cst_29 : f32 to vector<1x128xf32>
        %52 = arith.index_cast %arg19 : i32 to index
        %c0_30 = arith.constant 0 : index
        %53 = vector.load %arg10[%52, %c0_30] : memref<16x128xf32, #tpu.memory_space<vmem>>, vector<1x128xf32>
        tpu.vector_store %arg10[%52, %c0_30], %51 {strides = array<i32>} : memref<16x128xf32, #tpu.memory_space<vmem>>, vector<1x128xf32>,
        %54 = arith.index_cast %arg19 : i32 to index
        %c0_31 = arith.constant 0 : index
        %55 = vector.load %arg11[%54, %c0_31] : memref<16x128xf32, #tpu.memory_space<vmem>>, vector<1x128xf32>
        tpu.vector_store %arg11[%54, %c0_31], %51 {strides = array<i32>} : memref<16x128xf32, #tpu.memory_space<vmem>>, vector<1x128xf32>,
      } else {
      }
    }
    %c16_i32_14 = arith.constant 16 : i32
    return
  }
  func.func @transform_0(%arg0: i32, %arg1: i32, %arg2: memref<16xi32, #tpu.memory_space<smem>>) -> (i32, i32, i32) {
    %c0_i32 = arith.constant 0 : i32
    %c0_i32_0 = arith.constant 0 : i32
    return %arg1, %c0_i32, %arg0 : i32, i32, i32
  }
  func.func @transform_1(%arg0: i32, %arg1: i32, %arg2: memref<16xi32, #tpu.memory_space<smem>>) -> (i32, i32) {
    %c0_i32 = arith.constant 0 : i32
    %c0_i32_0 = arith.constant 0 : i32
    %c0_i32_1 = arith.constant 0 : i32
    return %c0_i32, %c0_i32_0 : i32, i32
  }
  func.func @transform_2(%arg0: i32, %arg1: i32, %arg2: memref<16xi32, #tpu.memory_space<smem>>) -> (i32, i32) {
    %c0_i32 = arith.constant 0 : i32
    %c0_i32_0 = arith.constant 0 : i32
    %c0_i32_1 = arith.constant 0 : i32
    return %c0_i32, %c0_i32_0 : i32, i32
  }
  func.func @transform_3(%arg0: i32, %arg1: i32, %arg2: memref<16xi32, #tpu.memory_space<smem>>) -> (i32, i32) {
    %c0_i32 = arith.constant 0 : i32
    %c0_i32_0 = arith.constant 0 : i32
    %c0_i32_1 = arith.constant 0 : i32
    return %c0_i32, %c0_i32_0 : i32, i32
  }
  func.func @transform_4(%arg0: i32, %arg1: i32, %arg2: memref<16xi32, #tpu.memory_space<smem>>) -> (i32, i32) {
    %c0_i32 = arith.constant 0 : i32
    %c0_i32_0 = arith.constant 0 : i32
    %c0_i32_1 = arith.constant 0 : i32
    return %c0_i32, %c0_i32_0 : i32, i32
  }
  func.func @transform_5(%arg0: i32, %arg1: i32, %arg2: memref<16xi32, #tpu.memory_space<smem>>) -> (i32, i32) {
    %c0_i32 = arith.constant 0 : i32
    %c0_i32_0 = arith.constant 0 : i32
    %c0_i32_1 = arith.constant 0 : i32
    return %c0_i32, %c0_i32_0 : i32, i32
  }
  func.func @transform_6(%arg0: i32, %arg1: i32, %arg2: memref<16xi32, #tpu.memory_space<smem>>) -> (i32, i32) {
    %c0_i32 = arith.constant 0 : i32
    %c0_i32_0 = arith.constant 0 : i32
    %c0_i32_1 = arith.constant 0 : i32
    return %c0_i32, %c0_i32_0 : i32, i32
  }
  func.func @transform_7(%arg0: i32, %arg1: i32, %arg2: memref<16xi32, #tpu.memory_space<smem>>) -> (i32, i32) {
    %c0_i32 = arith.constant 0 : i32
    return %arg1, %arg0 : i32, i32
  }
  func.func @transform_8(%arg0: i32, %arg1: i32, %arg2: memref<16xi32, #tpu.memory_space<smem>>) -> (i32, i32) {
    %c0_i32 = arith.constant 0 : i32
    return %arg1, %arg0 : i32, i32
  }
}

</mosaic_0001>

<llo_original>
// kernel: reverse.3
$region0: #{reverse.3}
  %s0 = inlined_call_operand.vmem [shape: f32[9,512], index: 0, kind: input, shape index: {}]
  %s1 = inlined_call_operand.vmem [shape: f32[9,512], index: 1, kind: output, shape index: {}]
  %v2 = vlaneseq
  %v3 = vsub.s32 127, %v2
  %4 = vset.pattern.permute.xlu0 %v3
  $region1: #{reverse.3} parent=0
    #allocation0 [shape = 'u8[16384]{0}', space=vmem, size = 0x4000, scoped, tag = 'operand span for operand 0']
    #allocation1 [shape = 'u8[16384]{0}', space=vmem, size = 0x4000, scoped, tag = 'operand span for operand 1']
    loop: start=0, step=1, limit=6
    $region2: #{reverse.3} parent=1 // loop_pre_header
      _
    $region3: #{reverse.3} parent=1 // loop_header
      %s6 = sphi 0, %s10
      %p7 = scmp.ge.s32.totalorder %s6, 6
      %s13 = sphi 0, %s25
      %s14 = sphi 0, %s21
      %s15 = sphi 0, %s13
      %s16 = sphi 0, %s14
      %s17 = sphi 0, %s15
      %s18 = sphi 0, %s16
    $region4: #{reverse.3} parent=1 // loop_header_branch
      %9 = sbr.rel (%p7) target = $region8
    $region5: #{reverse.3} parent=1 // loop_body
      %s11 = ssub.s32 %s6, 1
      %s12 = ssub.s32 %s6, 2
      %s19 = sadd.s32 1, %s14
      %p20 = scmp.ge.s32.totalorder %s19, 4
      %s21 = scalar_select %p20, 0, %s19
      %s22 = sadd.s32 1, %s13
      %s23 = scalar_select %p20, %s22, %s13
      %p24 = scmp.ge.s32.totalorder %s23, 1
      %s25 = scalar_select %p24, 0, %s23
      %p26 = scmp.le.s32.totalorder 1, %s6
      %p27 = scmp.lt.s32.totalorder %s6, 5
      %p28 = pnand %p26, %p27
      %p29 = pneg %p28
      // Predicated region
      $region9: #{reverse.3} parent=5 // pred_check
        _
      $region10: #{reverse.3} parent=5 // pred_check_branch
        %31 = sbr.rel (%p28) target = $region12
      $region11: #{reverse.3} parent=5 // pred_region
        %s32 = ssub.s32 %s6, 1
      $region12: #{reverse.3} parent=5 // pred_fallthru
        _
      %p33 = scmp.lt.s32.totalorder %s6, 4
      // Predicated region
      $region13: #{reverse.3} parent=5 // pred_check
        %p34 = pneg %p33
      $region14: #{reverse.3} parent=5 // pred_check_branch
        %36 = sbr.rel (%p34) target = $region16
      $region15: #{reverse.3} parent=5 // pred_region
        %s37 = sand.u32 %s6, 1
        %s38 = sand.u32 %s6, 1
        %s39 = smul.addr %s38, 16
        %s40 = scalar_lea.vmem [#allocation0], %s39
        %s41 = ssub.s32 3, %s14
        %s42 = smul.u32 2, %s13
        %s43 = smul.addr %s42, 4
        %s44 = sadd.s32 %s41, %s43
        %s45 = smul.addr %s44, 8
        %s46 = scalar_lea.vmem %s0, %s45
        // Predicated region
        $region17: #{reverse.3} parent=15 // pred_check
          _
        $region18: #{reverse.3} parent=15 // pred_check_branch
          %48 = sbr.rel (0) target = $region20
        $region19: #{reverse.3} parent=15 // pred_region
          // Predicated region
          $region21: #{reverse.3} parent=19 // pred_check
            _
          $region22: #{reverse.3} parent=19 // pred_check_branch
            %50 = sbr.rel (0) target = $region24
          $region23: #{reverse.3} parent=19 // pred_region
            // Predicated region
            $region36: #{reverse.3} parent=23 // pred_check
              _
            $region37: #{reverse.3} parent=23 // pred_check_branch
              %67 = sbr.rel (0) target = $region39
            $region38: #{reverse.3} parent=23 // pred_region
              loop: start=0, step=1, limit=1
              $region40: #{reverse.3} parent=38 // loop_pre_header
                _
              $region41: #{reverse.3} parent=38 // loop_header
                %s69 = sphi 0, %s73
                %p70 = scmp.ge.s32.totalorder %s69, 1
                %s74 = sphi %s46, %s46
                %s75 = sphi %s40, %s40
              $region42: #{reverse.3} parent=38 // loop_header_branch
                %72 = sbr.rel (%p70) target = $region46
              $region43: #{reverse.3} parent=38 // loop_body
                %v76 = vld [vmem:[%s74] sm:$0xff]
                %77 = vst [vmem:[%s75] sm:$0xff] %v76
                %v78 = vld [vmem:[%s74 + $0x20] sm:$0xff]
                %79 = vst [vmem:[%s75 + $0x8] sm:$0xff] %v78
              $region44: #{reverse.3} parent=38 // loop_footer
                %s73 = sadd.s32 1, %s69
              $region45: #{reverse.3} parent=38 // loop_footer_branch
                %68 = sbr.rel target = $region41
              $region46: #{reverse.3} parent=38 // loop_exit
                _
            $region39: #{reverse.3} parent=23 // pred_fallthru
              _
            // Predicated region
            $region47: #{reverse.3} parent=23 // pred_check
              _
            $region48: #{reverse.3} parent=23 // pred_check_branch
              %81 = sbr.rel target = $region50
            $region49: #{reverse.3} parent=23 // pred_region
              _
            $region50: #{reverse.3} parent=23 // pred_fallthru
              _
          $region24: #{reverse.3} parent=19 // pred_fallthru
            _
          // Predicated region
          $region25: #{reverse.3} parent=19 // pred_check
            _
          $region26: #{reverse.3} parent=19 // pred_check_branch
            %52 = sbr.rel target = $region28
          $region27: #{reverse.3} parent=19 // pred_region
            loop: start=0, step=1, limit=1
            $region29: #{reverse.3} parent=27 // loop_pre_header
              _
            $region30: #{reverse.3} parent=27 // loop_header
              %s55 = sphi 0, %s59
              %p56 = scmp.ge.s32.totalorder %s55, 1
              %s60 = sphi %s46, %s46
              %s61 = sphi %s40, %s40
            $region31: #{reverse.3} parent=27 // loop_header_branch
              %58 = sbr.rel (%p56) target = $region35
            $region32: #{reverse.3} parent=27 // loop_body
              %v62 = vld [vmem:[%s60] sm:$0xff]
              %63 = vst [vmem:[%s61] sm:$0xff] %v62
              %v64 = vld [vmem:[%s60 + $0x20] sm:$0xff]
              %65 = vst [vmem:[%s61 + $0x8] sm:$0xff] %v64
            $region33: #{reverse.3} parent=27 // loop_footer
              %s59 = sadd.s32 1, %s55
            $region34: #{reverse.3} parent=27 // loop_footer_branch
              %54 = sbr.rel target = $region30
            $region35: #{reverse.3} parent=27 // loop_exit
              _
          $region28: #{reverse.3} parent=19 // pred_fallthru
            _
        $region20: #{reverse.3} parent=15 // pred_fallthru
          _
        %82 = vnop
      $region16: #{reverse.3} parent=5 // pred_fallthru
        _
      %p83 = scmp.le.s32.totalorder 1, %s6
      %p84 = scmp.lt.s32.totalorder %s6, 5
      %p85 = pnand %p83, %p84
      %p86 = pneg %p85
      // Predicated region
      $region51: #{reverse.3} parent=5 // pred_check
        _
      $region52: #{reverse.3} parent=5 // pred_check_branch
        %88 = sbr.rel (%p85) target = $region54
      $region53: #{reverse.3} parent=5 // pred_region
        %s89 = ssub.s32 %s6, 1
        %s90 = sand.u32 %s11, 1
        %s91 = sand.u32 %s11, 1
        %s92 = smul.addr %s91, 16
        %s93 = scalar_lea.vmem [#allocation0], %s92
        %s94 = sand.u32 %s11, 1
        %s95 = sand.u32 %s11, 1
        %s96 = smul.addr %s95, 16
        %s97 = scalar_lea.vmem [#allocation0], %s96
        %s98 = sand.u32 %s11, 1
        %s99 = sand.u32 %s11, 1
        %s100 = smul.addr %s99, 16
        %s101 = scalar_lea.vmem [#allocation1], %s100
        %s102 = ssub.s32 3, %s16
        %s103 = smul.u32 2, %s15
        %s104 = smul.u32 2, %s15
        %v105 = vld [vmem:[%s93] sm:$0xff]
        %106 = vperm.xlu0 %4, %v105
        %v107 = vpop.permute.xlu0 %106
        %108 = vst [vmem:[%s101] sm:$0xff] %v107
        %s109 = scalar_lea.vmem %s101, 8 [#allocation1]
        %s110 = scalar_lea.vmem %s93, 8 [#allocation0]
        %v111 = vld [vmem:[%s110] sm:$0xff]
        %112 = vperm.xlu0 %4, %v111
        %v113 = vpop.permute.xlu0 %112
        %114 = vst [vmem:[%s109] sm:$0xff] %v113
        %s115 = sand.u32 %s11, 1
        %s116 = sand.u32 %s11, 1
        %s117 = smul.addr %s116, 16
        %s118 = scalar_lea.vmem [#allocation1], %s117
        %s119 = smul.u32 2, %s15
        %s120 = smul.addr %s119, 4
        %s121 = sadd.s32 %s16, %s120
        %s122 = smul.addr %s121, 8
        %s123 = scalar_lea.vmem %s1, %s122
        // Predicated region
        $region55: #{reverse.3} parent=53 // pred_check
          _
        $region56: #{reverse.3} parent=53 // pred_check_branch
          %125 = sbr.rel (0) target = $region58
        $region57: #{reverse.3} parent=53 // pred_region
          // Predicated region
          $region59: #{reverse.3} parent=57 // pred_check
            _
          $region60: #{reverse.3} parent=57 // pred_check_branch
            %127 = sbr.rel (0) target = $region62
          $region61: #{reverse.3} parent=57 // pred_region
            // Predicated region
            $region74: #{reverse.3} parent=61 // pred_check
              _
            $region75: #{reverse.3} parent=61 // pred_check_branch
              %144 = sbr.rel (0) target = $region77
            $region76: #{reverse.3} parent=61 // pred_region
              loop: start=0, step=1, limit=1
              $region78: #{reverse.3} parent=76 // loop_pre_header
                _
              $region79: #{reverse.3} parent=76 // loop_header
                %s146 = sphi 0, %s150
                %p147 = scmp.ge.s32.totalorder %s146, 1
                %s151 = sphi %s118, %s118
                %s152 = sphi %s123, %s123
              $region80: #{reverse.3} parent=76 // loop_header_branch
                %149 = sbr.rel (%p147) target = $region84
              $region81: #{reverse.3} parent=76 // loop_body
                %v153 = vld [vmem:[%s151] sm:$0xff]
                %154 = vst [vmem:[%s152] sm:$0xff] %v153
                %v155 = vld [vmem:[%s151 + $0x8] sm:$0xff]
                %156 = vst [vmem:[%s152 + $0x20] sm:$0xff] %v155
              $region82: #{reverse.3} parent=76 // loop_footer
                %s150 = sadd.s32 1, %s146
              $region83: #{reverse.3} parent=76 // loop_footer_branch
                %145 = sbr.rel target = $region79
              $region84: #{reverse.3} parent=76 // loop_exit
                _
            $region77: #{reverse.3} parent=61 // pred_fallthru
              _
            // Predicated region
            $region85: #{reverse.3} parent=61 // pred_check
              _
            $region86: #{reverse.3} parent=61 // pred_check_branch
              %158 = sbr.rel target = $region88
            $region87: #{reverse.3} parent=61 // pred_region
              _
            $region88: #{reverse.3} parent=61 // pred_fallthru
              _
          $region62: #{reverse.3} parent=57 // pred_fallthru
            _
          // Predicated region
          $region63: #{reverse.3} parent=57 // pred_check
            _
          $region64: #{reverse.3} parent=57 // pred_check_branch
            %129 = sbr.rel target = $region66
          $region65: #{reverse.3} parent=57 // pred_region
            loop: start=0, step=1, limit=1
            $region67: #{reverse.3} parent=65 // loop_pre_header
              _
            $region68: #{reverse.3} parent=65 // loop_header
              %s132 = sphi 0, %s136
              %p133 = scmp.ge.s32.totalorder %s132, 1
              %s137 = sphi %s118, %s118
              %s138 = sphi %s123, %s123
            $region69: #{reverse.3} parent=65 // loop_header_branch
              %135 = sbr.rel (%p133) target = $region73
            $region70: #{reverse.3} parent=65 // loop_body
              %v139 = vld [vmem:[%s137] sm:$0xff]
              %140 = vst [vmem:[%s138] sm:$0xff] %v139
              %v141 = vld [vmem:[%s137 + $0x8] sm:$0xff]
              %142 = vst [vmem:[%s138 + $0x20] sm:$0xff] %v141
            $region71: #{reverse.3} parent=65 // loop_footer
              %s136 = sadd.s32 1, %s132
            $region72: #{reverse.3} parent=65 // loop_footer_branch
              %131 = sbr.rel target = $region68
            $region73: #{reverse.3} parent=65 // loop_exit
              _
          $region66: #{reverse.3} parent=57 // pred_fallthru
            _
        $region58: #{reverse.3} parent=53 // pred_fallthru
          _
        %159 = vnop
      $region54: #{reverse.3} parent=5 // pred_fallthru
        _
      %p160 = scmp.le.s32.totalorder 2, %s6
      // Predicated region
      $region89: #{reverse.3} parent=5 // pred_check
        %p161 = pneg %p160
      $region90: #{reverse.3} parent=5 // pred_check_branch
        %163 = sbr.rel (%p161) target = $region92
      $region91: #{reverse.3} parent=5 // pred_region
        %s164 = ssub.s32 %s6, 2
        %s165 = sand.u32 %s12, 1
        %s166 = sand.u32 %s12, 1
        %s167 = smul.addr %s166, 16
        %s168 = scalar_lea.vmem [#allocation1], %s167
      $region92: #{reverse.3} parent=5 // pred_fallthru
        _
    $region6: #{reverse.3} parent=1 // loop_footer
      %s10 = sadd.s32 1, %s6
    $region7: #{reverse.3} parent=1 // loop_footer_branch
      %5 = sbr.rel target = $region3
    $region8: #{reverse.3} parent=1 // loop_exit
      _

// kernel: nkf_forward.1
$region0: #{nkf_forward.1}
  #allocation0 [shape = 'u32[]', space=smem, size = 0x4, offset = 0x4, fixed_abs, tag = 'smem constant byte address 0x4 - core index']
  #allocation1 [shape = 'u32[144,128]{1,0:T(1,128)}', space=vmem, size = 0x12000, scoped, tag = 'internal scratch']
  #allocation2 [shape = 'f32[4,128]{1,0:T(4,128)}', space=vmem, size = 0x800, scoped, tag = 'scratch operand']
  #allocation3 [shape = 'f32[4,128]{1,0:T(4,128)}', space=vmem, size = 0x800, scoped, tag = 'scratch operand']
  #allocation4 [shape = 'f32[4,128]{1,0:T(4,128)}', space=vmem, size = 0x800, scoped, tag = 'scratch operand']
  #allocation5 [shape = 'f32[4,128]{1,0:T(4,128)}', space=vmem, size = 0x800, scoped, tag = 'scratch operand']
  #allocation6 [shape = 'f32[4,128]{1,0:T(4,128)}', space=vmem, size = 0x800, scoped, tag = 'scratch operand']
  #allocation7 [shape = 'f32[4,128]{1,0:T(4,128)}', space=vmem, size = 0x800, scoped, tag = 'scratch operand']
  #allocation8 [shape = 'f32[49,256]{1,0:T(8,128)}', space=vmem, size = 0xe000, scoped, tag = 'scratch operand']
  #allocation9 [shape = 's32[1]{0}', space=sflag, size = 0x4, scoped, tag = 'scoped memory for nkf_forward.1']
  #allocation10 [shape = 'u8[512]{0}', space=smem, size = 0x200, scoped, tag = 'prefetched SMEM operand 0']
  %s0 = inlined_call_operand.vmem [shape: s32[16], index: 0, kind: input, shape index: {}]
  %s1 = inlined_call_operand.vmem [shape: f32[16,8,640], index: 1, kind: input, shape index: {}]
  %s2 = inlined_call_operand.vmem [shape: f32[48,10], index: 2, kind: input, shape index: {}]
  %s3 = inlined_call_operand.vmem [shape: f32[144,25], index: 3, kind: input, shape index: {}]
  %s4 = inlined_call_operand.vmem [shape: f32[144,49], index: 4, kind: input, shape index: {}]
  %s5 = inlined_call_operand.vmem [shape: f32[48,25], index: 5, kind: input, shape index: {}]
  %s6 = inlined_call_operand.vmem [shape: f32[8,25], index: 6, kind: input, shape index: {}]
  %s7 = inlined_call_operand.vmem [shape: f32[1,2], index: 7, kind: input, shape index: {}]
  %s8 = inlined_call_operand.vmem [shape: f32[16,640], index: 8, kind: output, shape index: {0}]
  %s9 = inlined_call_operand.vmem [shape: f32[16,640], index: 9, kind: output, shape index: {1}]
  %10 = xla_tuple %s8, %s9
  %s11 = sld [smem:[#allocation0]]
  $region194: #{nkf_forward.1} parent=0
    _
  %s13 = ssub.s32 1, %s11
  %s14 = scalar_select 0, %s13, %s11
  %s15 = sshll.u32 %s0, 4
  %s16 = int_to_ptr.vmem [resolvable:$true] %s15
  %18 = dma.vmem_to_smem %s16, 16, [#allocation10], [#allocation9]
  %19 = dma.done [#allocation9], 16
  %20 = sfence
  $region1: #{nkf_forward.1} parent=0
    #allocation11 [shape = 'u8[131072]{0}', space=vmem, size = 0x20000, scoped, tag = 'input window, operand 1']
    #allocation12 [shape = 'u8[16384]{0}', space=vmem, size = 0x4000, scoped, tag = 'output window, operand 0']
    #allocation13 [shape = 'u8[16384]{0}', space=vmem, size = 0x4000, scoped, tag = 'output window, operand 1']
    loop: start=0, step=1, limit=7
    $region2: #{nkf_forward.1} parent=1 // loop_pre_header
      _
    $region3: #{nkf_forward.1} parent=1 // loop_header
      %s22 = sphi 0, %s26
      %p23 = scmp.ge.s32.totalorder %s22, 7
      %s29 = sphi 0, %s41
      %s30 = sphi 0, %s37
      %s31 = sphi 0, %s29
      %s32 = sphi 0, %s30
      %s33 = sphi 0, %s31
      %s34 = sphi 0, %s32
      %s46 = sphi 0, %s48
      %s49 = sphi 0, %s46
      %s50 = sphi 0, %s49
      %s66 = sphi 0, %s50
      %s70 = sphi 0, %s70
      %s72 = sphi 0, %s70
      %s73 = sphi 0, %s72
      %s87 = sphi 0, %s73
      %s91 = sphi 0, %s91
      %s93 = sphi 0, %s91
      %s94 = sphi 0, %s93
      %s108 = sphi 0, %s94
      %s112 = sphi 0, %s112
      %s114 = sphi 0, %s112
      %s115 = sphi 0, %s114
      %s129 = sphi 0, %s115
      %s133 = sphi 0, %s133
      %s135 = sphi 0, %s133
      %s136 = sphi 0, %s135
      %s150 = sphi 0, %s136
      %s154 = sphi 0, %s154
      %s156 = sphi 0, %s154
      %s157 = sphi 0, %s156
      %s171 = sphi 0, %s157
      %s175 = sphi 0, %s175
      %s177 = sphi 0, %s175
      %s178 = sphi 0, %s177
      %s192 = sphi 0, %s178
      %s200 = sphi 0, %s202
      %s203 = sphi 0, %s200
      %s204 = sphi 0, %s203
      %s220 = sphi 0, %s204
      %s228 = sphi 0, %s230
      %s231 = sphi 0, %s228
      %s232 = sphi 0, %s231
      %s248 = sphi 0, %s232
    $region4: #{nkf_forward.1} parent=1 // loop_header_branch
      %25 = sbr.rel (%p23) target = $region8
    $region5: #{nkf_forward.1} parent=1 // loop_body
      %s27 = ssub.s32 %s22, 1
      %s28 = ssub.s32 %s22, 2
      %s35 = sadd.s32 1, %s30
      %p36 = scmp.ge.s32.totalorder %s35, 1
      %s37 = scalar_select %p36, 0, %s35
      %s38 = sadd.s32 1, %s29
      %s39 = scalar_select %p36, %s38, %s29
      %p40 = scmp.ge.s32.totalorder %s39, 5
      %s41 = scalar_select %p40, 0, %s39
      %s42 = ssub.s32 %s30, %s37
      %s43 = ssub.s32 %s29, %s41
      %s44 = sor.u32 %s42, %s43
      %p45 = scmp.eq.s32.totalorder %s44, 0
      %s47 = sadd.s32 %s46, 1
      %s48 = scalar_select %p45, %s46, %s47
      %p51 = pneg %p45
      %p52 = scmp.eq.s32.totalorder %s22, 4
      %p53 = por %p51, %p52
      %p54 = scmp.ne.s32.totalorder %s46, %s49
      %p55 = scmp.eq.s32.totalorder %s22, 0
      %p56 = por %p54, %p55
      %p57 = scmp.ne.s32.totalorder %s46, %s49
      %p58 = scmp.eq.s32.totalorder %s27, 4
      %p59 = por %p57, %p58
      %p60 = scmp.ne.s32.totalorder %s49, %s50
      %p61 = scmp.eq.s32.totalorder %s27, 0
      %p62 = por %p60, %p61
      %p63 = scmp.ne.s32.totalorder %s49, %s50
      %p64 = scmp.eq.s32.totalorder %s28, 4
      %p65 = por %p63, %p64
      %p67 = scmp.ne.s32.totalorder %s50, %s66
      %p68 = scmp.eq.s32.totalorder %s28, 0
      %p69 = por %p67, %p68
      %s71 = sadd.s32 %s70, 1
      %p74 = scmp.eq.s32.totalorder %s22, 4
      %p75 = scmp.ne.s32.totalorder %s70, %s72
      %p76 = scmp.eq.s32.totalorder %s22, 0
      %p77 = por %p75, %p76
      %p78 = scmp.ne.s32.totalorder %s70, %s72
      %p79 = scmp.eq.s32.totalorder %s27, 4
      %p80 = por %p78, %p79
      %p81 = scmp.ne.s32.totalorder %s72, %s73
      %p82 = scmp.eq.s32.totalorder %s27, 0
      %p83 = por %p81, %p82
      %p84 = scmp.ne.s32.totalorder %s72, %s73
      %p85 = scmp.eq.s32.totalorder %s28, 4
      %p86 = por %p84, %p85
      %p88 = scmp.ne.s32.totalorder %s73, %s87
      %p89 = scmp.eq.s32.totalorder %s28, 0
      %p90 = por %p88, %p89
      %s92 = sadd.s32 %s91, 1
      %p95 = scmp.eq.s32.totalorder %s22, 4
      %p96 = scmp.ne.s32.totalorder %s91, %s93
      %p97 = scmp.eq.s32.totalorder %s22, 0
      %p98 = por %p96, %p97
      %p99 = scmp.ne.s32.totalorder %s91, %s93
      %p100 = scmp.eq.s32.totalorder %s27, 4
      %p101 = por %p99, %p100
      %p102 = scmp.ne.s32.totalorder %s93, %s94
      %p103 = scmp.eq.s32.totalorder %s27, 0
      %p104 = por %p102, %p103
      %p105 = scmp.ne.s32.totalorder %s93, %s94
      %p106 = scmp.eq.s32.totalorder %s28, 4
      %p107 = por %p105, %p106
      %p109 = scmp.ne.s32.totalorder %s94, %s108
      %p110 = scmp.eq.s32.totalorder %s28, 0
      %p111 = por %p109, %p110
      %s113 = sadd.s32 %s112, 1
      %p116 = scmp.eq.s32.totalorder %s22, 4
      %p117 = scmp.ne.s32.totalorder %s112, %s114
      %p118 = scmp.eq.s32.totalorder %s22, 0
      %p119 = por %p117, %p118
      %p120 = scmp.ne.s32.totalorder %s112, %s114
      %p121 = scmp.eq.s32.totalorder %s27, 4
      %p122 = por %p120, %p121
      %p123 = scmp.ne.s32.totalorder %s114, %s115
      %p124 = scmp.eq.s32.totalorder %s27, 0
      %p125 = por %p123, %p124
      %p126 = scmp.ne.s32.totalorder %s114, %s115
      %p127 = scmp.eq.s32.totalorder %s28, 4
      %p128 = por %p126, %p127
      %p130 = scmp.ne.s32.totalorder %s115, %s129
      %p131 = scmp.eq.s32.totalorder %s28, 0
      %p132 = por %p130, %p131
      %s134 = sadd.s32 %s133, 1
      %p137 = scmp.eq.s32.totalorder %s22, 4
      %p138 = scmp.ne.s32.totalorder %s133, %s135
      %p139 = scmp.eq.s32.totalorder %s22, 0
      %p140 = por %p138, %p139
      %p141 = scmp.ne.s32.totalorder %s133, %s135
      %p142 = scmp.eq.s32.totalorder %s27, 4
      %p143 = por %p141, %p142
      %p144 = scmp.ne.s32.totalorder %s135, %s136
      %p145 = scmp.eq.s32.totalorder %s27, 0
      %p146 = por %p144, %p145
      %p147 = scmp.ne.s32.totalorder %s135, %s136
      %p148 = scmp.eq.s32.totalorder %s28, 4
      %p149 = por %p147, %p148
      %p151 = scmp.ne.s32.totalorder %s136, %s150
      %p152 = scmp.eq.s32.totalorder %s28, 0
      %p153 = por %p151, %p152
      %s155 = sadd.s32 %s154, 1
      %p158 = scmp.eq.s32.totalorder %s22, 4
      %p159 = scmp.ne.s32.totalorder %s154, %s156
      %p160 = scmp.eq.s32.totalorder %s22, 0
      %p161 = por %p159, %p160
      %p162 = scmp.ne.s32.totalorder %s154, %s156
      %p163 = scmp.eq.s32.totalorder %s27, 4
      %p164 = por %p162, %p163
      %p165 = scmp.ne.s32.totalorder %s156, %s157
      %p166 = scmp.eq.s32.totalorder %s27, 0
      %p167 = por %p165, %p166
      %p168 = scmp.ne.s32.totalorder %s156, %s157
      %p169 = scmp.eq.s32.totalorder %s28, 4
      %p170 = por %p168, %p169
      %p172 = scmp.ne.s32.totalorder %s157, %s171
      %p173 = scmp.eq.s32.totalorder %s28, 0
      %p174 = por %p172, %p173
      %s176 = sadd.s32 %s175, 1
      %p179 = scmp.eq.s32.totalorder %s22, 4
      %p180 = scmp.ne.s32.totalorder %s175, %s177
      %p181 = scmp.eq.s32.totalorder %s22, 0
      %p182 = por %p180, %p181
      %p183 = scmp.ne.s32.totalorder %s175, %s177
      %p184 = scmp.eq.s32.totalorder %s27, 4
      %p185 = por %p183, %p184
      %p186 = scmp.ne.s32.totalorder %s177, %s178
      %p187 = scmp.eq.s32.totalorder %s27, 0
      %p188 = por %p186, %p187
      %p189 = scmp.ne.s32.totalorder %s177, %s178
      %p190 = scmp.eq.s32.totalorder %s28, 4
      %p191 = por %p189, %p190
      %p193 = scmp.ne.s32.totalorder %s178, %s192
      %p194 = scmp.eq.s32.totalorder %s28, 0
      %p195 = por %p193, %p194
      %s196 = ssub.s32 %s30, %s37
      %s197 = ssub.s32 %s29, %s41
      %s198 = sor.u32 %s196, %s197
      %p199 = scmp.eq.s32.totalorder %s198, 0
      %s201 = sadd.s32 %s200, 1
      %s202 = scalar_select %p199, %s200, %s201
      %p205 = pneg %p199
      %p206 = scmp.eq.s32.totalorder %s22, 4
      %p207 = por %p205, %p206
      %p208 = scmp.ne.s32.totalorder %s200, %s203
      %p209 = scmp.eq.s32.totalorder %s22, 0
      %p210 = por %p208, %p209
      %p211 = scmp.ne.s32.totalorder %s200, %s203
      %p212 = scmp.eq.s32.totalorder %s27, 4
      %p213 = por %p211, %p212
      %p214 = scmp.ne.s32.totalorder %s203, %s204
      %p215 = scmp.eq.s32.totalorder %s27, 0
      %p216 = por %p214, %p215
      %p217 = scmp.ne.s32.totalorder %s203, %s204
      %p218 = scmp.eq.s32.totalorder %s28, 4
      %p219 = por %p217, %p218
      %p221 = scmp.ne.s32.totalorder %s204, %s220
      %p222 = scmp.eq.s32.totalorder %s28, 0
      %p223 = por %p221, %p222
      %s224 = ssub.s32 %s30, %s37
      %s225 = ssub.s32 %s29, %s41
      %s226 = sor.u32 %s224, %s225
      %p227 = scmp.eq.s32.totalorder %s226, 0
      %s229 = sadd.s32 %s228, 1
      %s230 = scalar_select %p227, %s228, %s229
      %p233 = pneg %p227
      %p234 = scmp.eq.s32.totalorder %s22, 4
      %p235 = por %p233, %p234
      %p236 = scmp.ne.s32.totalorder %s228, %s231
      %p237 = scmp.eq.s32.totalorder %s22, 0
      %p238 = por %p236, %p237
      %p239 = scmp.ne.s32.totalorder %s228, %s231
      %p240 = scmp.eq.s32.totalorder %s27, 4
      %p241 = por %p239, %p240
      %p242 = scmp.ne.s32.totalorder %s231, %s232
      %p243 = scmp.eq.s32.totalorder %s27, 0
      %p244 = por %p242, %p243
      %p245 = scmp.ne.s32.totalorder %s231, %s232
      %p246 = scmp.eq.s32.totalorder %s28, 4
      %p247 = por %p245, %p246
      %p249 = scmp.ne.s32.totalorder %s232, %s248
      %p250 = scmp.eq.s32.totalorder %s28, 0
      %p251 = por %p249, %p250
      %p252 = scmp.le.s32.totalorder 1, %s22
      %p253 = scmp.lt.s32.totalorder %s22, 6
      %p254 = pnand %p252, %p253
      %p255 = pneg %p254
      // Predicated region
      $region9: #{nkf_forward.1} parent=5 // pred_check
        _
      $region10: #{nkf_forward.1} parent=5 // pred_check_branch
        %257 = sbr.rel (%p254) target = $region12
      $region11: #{nkf_forward.1} parent=5 // pred_region
        %s258 = ssub.s32 %s22, 1
        // Predicated region
        $region13: #{nkf_forward.1} parent=11 // pred_check
          %p259 = pneg %p83
        $region14: #{nkf_forward.1} parent=11 // pred_check_branch
          %261 = sbr.rel (%p259) target = $region16
        $region15: #{nkf_forward.1} parent=11 // pred_region
          _
        $region16: #{nkf_forward.1} parent=11 // pred_fallthru
          _
        // Predicated region
        $region17: #{nkf_forward.1} parent=11 // pred_check
          %p262 = pneg %p104
        $region18: #{nkf_forward.1} parent=11 // pred_check_branch
          %264 = sbr.rel (%p262) target = $region20
        $region19: #{nkf_forward.1} parent=11 // pred_region
          _
        $region20: #{nkf_forward.1} parent=11 // pred_fallthru
          _
        // Predicated region
        $region21: #{nkf_forward.1} parent=11 // pred_check
          %p265 = pneg %p125
        $region22: #{nkf_forward.1} parent=11 // pred_check_branch
          %267 = sbr.rel (%p265) target = $region24
        $region23: #{nkf_forward.1} parent=11 // pred_region
          _
        $region24: #{nkf_forward.1} parent=11 // pred_fallthru
          _
        // Predicated region
        $region25: #{nkf_forward.1} parent=11 // pred_check
          %p268 = pneg %p146
        $region26: #{nkf_forward.1} parent=11 // pred_check_branch
          %270 = sbr.rel (%p268) target = $region28
        $region27: #{nkf_forward.1} parent=11 // pred_region
          _
        $region28: #{nkf_forward.1} parent=11 // pred_fallthru
          _
        // Predicated region
        $region29: #{nkf_forward.1} parent=11 // pred_check
          %p271 = pneg %p167
        $region30: #{nkf_forward.1} parent=11 // pred_check_branch
          %273 = sbr.rel (%p271) target = $region32
        $region31: #{nkf_forward.1} parent=11 // pred_region
          _
        $region32: #{nkf_forward.1} parent=11 // pred_fallthru
          _
        // Predicated region
        $region33: #{nkf_forward.1} parent=11 // pred_check
          %p274 = pneg %p188
        $region34: #{nkf_forward.1} parent=11 // pred_check_branch
          %276 = sbr.rel (%p274) target = $region36
        $region35: #{nkf_forward.1} parent=11 // pred_region
          _
        $region36: #{nkf_forward.1} parent=11 // pred_fallthru
          _
      $region12: #{nkf_forward.1} parent=5 // pred_fallthru
        _
      %p277 = scmp.lt.s32.totalorder %s22, 5
      // Predicated region
      $region37: #{nkf_forward.1} parent=5 // pred_check
        %p278 = pneg %p277
      $region38: #{nkf_forward.1} parent=5 // pred_check_branch
        %280 = sbr.rel (%p278) target = $region40
      $region39: #{nkf_forward.1} parent=5 // pred_region
        // Predicated region
        $region41: #{nkf_forward.1} parent=39 // pred_check
          %p281 = pneg %p56
        $region42: #{nkf_forward.1} parent=39 // pred_check_branch
          %283 = sbr.rel (%p281) target = $region44
        $region43: #{nkf_forward.1} parent=39 // pred_region
          %s284 = sand.u32 %s46, 1
          %s285 = sand.u32 %s46, 1
          %s286 = smul.addr %s285, 128
          %s287 = scalar_lea.vmem [#allocation11], %s286
          %s288 = smul.u32 16, %s30
          %s289 = smul.addr %s288, 5
          %s290 = sadd.s32 %s29, %s289
          %s291 = smul.addr %s290, 8
          %s292 = scalar_lea.vmem %s1, %s291
          // Predicated region
          $region45: #{nkf_forward.1} parent=43 // pred_check
            _
          $region46: #{nkf_forward.1} parent=43 // pred_check_branch
            %294 = sbr.rel (0) target = $region48
          $region47: #{nkf_forward.1} parent=43 // pred_region
            // Predicated region
            $region49: #{nkf_forward.1} parent=47 // pred_check
              _
            $region50: #{nkf_forward.1} parent=47 // pred_check_branch
              %296 = sbr.rel (0) target = $region52
            $region51: #{nkf_forward.1} parent=47 // pred_region
              // Predicated region
              $region64: #{nkf_forward.1} parent=51 // pred_check
                _
              $region65: #{nkf_forward.1} parent=51 // pred_check_branch
                %341 = sbr.rel (0) target = $region67
              $region66: #{nkf_forward.1} parent=51 // pred_region
                loop: start=0, step=1, limit=1
                $region68: #{nkf_forward.1} parent=66 // loop_pre_header
                  _
                $region69: #{nkf_forward.1} parent=66 // loop_header
                  %s343 = sphi 0, %s347
                  %p344 = scmp.ge.s32.totalorder %s343, 1
                  %s348 = sphi %s292, %s292
                  %s349 = sphi %s287, %s287
                $region70: #{nkf_forward.1} parent=66 // loop_header_branch
                  %346 = sbr.rel (%p344) target = $region74
                $region71: #{nkf_forward.1} parent=66 // loop_body
                  %v350 = vld [vmem:[%s348] sm:$0xff]
                  %351 = vst [vmem:[%s349] sm:$0xff] %v350
                  %v352 = vld [vmem:[%s348 + $0x28] sm:$0xff]
                  %353 = vst [vmem:[%s349 + $0x8] sm:$0xff] %v352
                  %v354 = vld [vmem:[%s348 + $0x50] sm:$0xff]
                  %355 = vst [vmem:[%s349 + $0x10] sm:$0xff] %v354
                  %v356 = vld [vmem:[%s348 + $0x78] sm:$0xff]
                  %357 = vst [vmem:[%s349 + $0x18] sm:$0xff] %v356
                  %v358 = vld [vmem:[%s348 + $0xa0] sm:$0xff]
                  %359 = vst [vmem:[%s349 + $0x20] sm:$0xff] %v358
                  %v360 = vld [vmem:[%s348 + $0xc8] sm:$0xff]
                  %361 = vst [vmem:[%s349 + $0x28] sm:$0xff] %v360
                  %v362 = vld [vmem:[%s348 + $0xf0] sm:$0xff]
                  %363 = vst [vmem:[%s349 + $0x30] sm:$0xff] %v362
                  %v364 = vld [vmem:[%s348 + $0x118] sm:$0xff]
                  %365 = vst [vmem:[%s349 + $0x38] sm:$0xff] %v364
                  %v366 = vld [vmem:[%s348 + $0x140] sm:$0xff]
                  %367 = vst [vmem:[%s349 + $0x40] sm:$0xff] %v366
                  %v368 = vld [vmem:[%s348 + $0x168] sm:$0xff]
                  %369 = vst [vmem:[%s349 + $0x48] sm:$0xff] %v368
                  %v370 = vld [vmem:[%s348 + $0x190] sm:$0xff]
                  %371 = vst [vmem:[%s349 + $0x50] sm:$0xff] %v370
                  %v372 = vld [vmem:[%s348 + $0x1b8] sm:$0xff]
                  %373 = vst [vmem:[%s349 + $0x58] sm:$0xff] %v372
                  %v374 = vld [vmem:[%s348 + $0x1e0] sm:$0xff]
                  %375 = vst [vmem:[%s349 + $0x60] sm:$0xff] %v374
                  %v376 = vld [vmem:[%s348 + $0x208] sm:$0xff]
                  %377 = vst [vmem:[%s349 + $0x68] sm:$0xff] %v376
                  %v378 = vld [vmem:[%s348 + $0x230] sm:$0xff]
                  %379 = vst [vmem:[%s349 + $0x70] sm:$0xff] %v378
                  %v380 = vld [vmem:[%s348 + $0x258] sm:$0xff]
                  %381 = vst [vmem:[%s349 + $0x78] sm:$0xff] %v380
                $region72: #{nkf_forward.1} parent=66 // loop_footer
                  %s347 = sadd.s32 1, %s343
                $region73: #{nkf_forward.1} parent=66 // loop_footer_branch
                  %342 = sbr.rel target = $region69
                $region74: #{nkf_forward.1} parent=66 // loop_exit
                  _
              $region67: #{nkf_forward.1} parent=51 // pred_fallthru
                _
              // Predicated region
              $region75: #{nkf_forward.1} parent=51 // pred_check
                _
              $region76: #{nkf_forward.1} parent=51 // pred_check_branch
                %383 = sbr.rel target = $region78
              $region77: #{nkf_forward.1} parent=51 // pred_region
                _
              $region78: #{nkf_forward.1} parent=51 // pred_fallthru
                _
            $region52: #{nkf_forward.1} parent=47 // pred_fallthru
              _
            // Predicated region
            $region53: #{nkf_forward.1} parent=47 // pred_check
              _
            $region54: #{nkf_forward.1} parent=47 // pred_check_branch
              %298 = sbr.rel target = $region56
            $region55: #{nkf_forward.1} parent=47 // pred_region
              loop: start=0, step=1, limit=1
              $region57: #{nkf_forward.1} parent=55 // loop_pre_header
                _
              $region58: #{nkf_forward.1} parent=55 // loop_header
                %s301 = sphi 0, %s305
                %p302 = scmp.ge.s32.totalorder %s301, 1
                %s306 = sphi %s292, %s292
                %s307 = sphi %s287, %s287
              $region59: #{nkf_forward.1} parent=55 // loop_header_branch
                %304 = sbr.rel (%p302) target = $region63
              $region60: #{nkf_forward.1} parent=55 // loop_body
                %v308 = vld [vmem:[%s306] sm:$0xff]
                %309 = vst [vmem:[%s307] sm:$0xff] %v308
                %v310 = vld [vmem:[%s306 + $0x28] sm:$0xff]
                %311 = vst [vmem:[%s307 + $0x8] sm:$0xff] %v310
                %v312 = vld [vmem:[%s306 + $0x50] sm:$0xff]
                %313 = vst [vmem:[%s307 + $0x10] sm:$0xff] %v312
                %v314 = vld [vmem:[%s306 + $0x78] sm:$0xff]
                %315 = vst [vmem:[%s307 + $0x18] sm:$0xff] %v314
                %v316 = vld [vmem:[%s306 + $0xa0] sm:$0xff]
                %317 = vst [vmem:[%s307 + $0x20] sm:$0xff] %v316
                %v318 = vld [vmem:[%s306 + $0xc8] sm:$0xff]
                %319 = vst [vmem:[%s307 + $0x28] sm:$0xff] %v318
                %v320 = vld [vmem:[%s306 + $0xf0] sm:$0xff]
                %321 = vst [vmem:[%s307 + $0x30] sm:$0xff] %v320
                %v322 = vld [vmem:[%s306 + $0x118] sm:$0xff]
                %323 = vst [vmem:[%s307 + $0x38] sm:$0xff] %v322
                %v324 = vld [vmem:[%s306 + $0x140] sm:$0xff]
                %325 = vst [vmem:[%s307 + $0x40] sm:$0xff] %v324
                %v326 = vld [vmem:[%s306 + $0x168] sm:$0xff]
                %327 = vst [vmem:[%s307 + $0x48] sm:$0xff] %v326
                %v328 = vld [vmem:[%s306 + $0x190] sm:$0xff]
                %329 = vst [vmem:[%s307 + $0x50] sm:$0xff] %v328
                %v330 = vld [vmem:[%s306 + $0x1b8] sm:$0xff]
                %331 = vst [vmem:[%s307 + $0x58] sm:$0xff] %v330
                %v332 = vld [vmem:[%s306 + $0x1e0] sm:$0xff]
                %333 = vst [vmem:[%s307 + $0x60] sm:$0xff] %v332
                %v334 = vld [vmem:[%s306 + $0x208] sm:$0xff]
                %335 = vst [vmem:[%s307 + $0x68] sm:$0xff] %v334
                %v336 = vld [vmem:[%s306 + $0x230] sm:$0xff]
                %337 = vst [vmem:[%s307 + $0x70] sm:$0xff] %v336
                %v338 = vld [vmem:[%s306 + $0x258] sm:$0xff]
                %339 = vst [vmem:[%s307 + $0x78] sm:$0xff] %v338
              $region61: #{nkf_forward.1} parent=55 // loop_footer
                %s305 = sadd.s32 1, %s301
              $region62: #{nkf_forward.1} parent=55 // loop_footer_branch
                %300 = sbr.rel target = $region58
              $region63: #{nkf_forward.1} parent=55 // loop_exit
                _
            $region56: #{nkf_forward.1} parent=47 // pred_fallthru
              _
          $region48: #{nkf_forward.1} parent=43 // pred_fallthru
            _
          %384 = vnop
        $region44: #{nkf_forward.1} parent=39 // pred_fallthru
          _
      $region40: #{nkf_forward.1} parent=5 // pred_fallthru
        _
      %p385 = scmp.le.s32.totalorder 1, %s22
      %p386 = scmp.lt.s32.totalorder %s22, 6
      %p387 = pnand %p385, %p386
      %p388 = pneg %p387
      // Predicated region
      $region79: #{nkf_forward.1} parent=5 // pred_check
        _
      $region80: #{nkf_forward.1} parent=5 // pred_check_branch
        %390 = sbr.rel (%p387) target = $region82
      $region81: #{nkf_forward.1} parent=5 // pred_region
        %s391 = ssub.s32 %s22, 1
        %s392 = sand.u32 %s49, 1
        %s393 = sand.u32 %s49, 1
        %s394 = smul.addr %s393, 128
        %s395 = scalar_lea.vmem [#allocation11], %s394
        // Predicated region
        $region83: #{nkf_forward.1} parent=81 // pred_check
          %p396 = pneg %p62
        $region84: #{nkf_forward.1} parent=81 // pred_check_branch
          %398 = sbr.rel (%p396) target = $region86
        $region85: #{nkf_forward.1} parent=81 // pred_region
          _
        $region86: #{nkf_forward.1} parent=81 // pred_fallthru
          _
        %s399 = sand.u32 %s49, 1
        %s400 = sand.u32 %s49, 1
        %s401 = smul.addr %s400, 128
        %s402 = scalar_lea.vmem [#allocation11], %s401
        %p403 = pneg %p62
        %p404 = pneg %p59
        %p405 = pneg %p83
        %p406 = pneg %p80
        %p407 = pneg %p104
        %p408 = pneg %p101
        %p409 = pneg %p125
        %p410 = pneg %p122
        %p411 = pneg %p146
        %p412 = pneg %p143
        %p413 = pneg %p167
        %p414 = pneg %p164
        %p415 = pneg %p188
        %p416 = pneg %p185
        %p417 = pneg %p216
        %p418 = pneg %p213
        %s419 = sand.u32 %s203, 1
        %s420 = sand.u32 %s203, 1
        %s421 = smul.addr %s420, 16
        %s422 = scalar_lea.vmem [#allocation12], %s421
        %p423 = pneg %p244
        %p424 = pneg %p241
        %s425 = sand.u32 %s231, 1
        %s426 = sand.u32 %s231, 1
        %s427 = smul.addr %s426, 16
        %s428 = scalar_lea.vmem [#allocation13], %s427
        %s429 = smul.u32 16, %s32
        %s430 = smul.u32 2, %s32
        %s431 = smul.u32 2, %s32
        %p432 = scmp.eq.s32.totalorder %s32, 0
        // Predicated region
        $region87: #{nkf_forward.1} parent=81 // pred_check
          %p433 = pneg %p432
        $region88: #{nkf_forward.1} parent=81 // pred_check_branch
          %435 = sbr.rel (%p433) target = $region90
        $region89: #{nkf_forward.1} parent=81 // pred_region
          %436 = vst [vmem:[#allocation2] sm:$0xf] 0.0
          %437 = vst [vmem:[#allocation3] sm:$0xf] 0.0
          %438 = vst [vmem:[#allocation4] sm:$0xf] 0.0
          %439 = vst [vmem:[#allocation5] sm:$0xf] 0.0
          %440 = vst [vmem:[#allocation6] sm:$0xf] 0.0
          %441 = vst [vmem:[#allocation7] sm:$0xf] 0.0
          %442 = vst [vmem:[#allocation8] sm:$0xff] 0.0
          %443 = vst [vmem:[#allocation8 + $0x8] sm:$0xff] 0.0
          %444 = vst [vmem:[#allocation8 + $0x10] sm:$0xff] 0.0
          %445 = vst [vmem:[#allocation8 + $0x18] sm:$0xff] 0.0
          %446 = vst [vmem:[#allocation8 + $0x20] sm:$0xff] 0.0
          %447 = vst [vmem:[#allocation8 + $0x28] sm:$0xff] 0.0
          %448 = vst [vmem:[#allocation8 + $0x30] sm:$0xff] 0.0
          %449 = vst [vmem:[#allocation8 + $0x38] sm:$0xff] 0.0
          %450 = vst [vmem:[#allocation8 + $0x40] sm:$0xff] 0.0
          %451 = vst [vmem:[#allocation8 + $0x48] sm:$0xff] 0.0
          %452 = vst [vmem:[#allocation8 + $0x50] sm:$0xff] 0.0
          %453 = vst [vmem:[#allocation8 + $0x58] sm:$0xff] 0.0
          %454 = vst [vmem:[#allocation8 + $0x60] sm:$0x1] 1.0
          %455 = vst [vmem:[#allocation8 + $0x68] sm:$0x1] 1.0
        $region90: #{nkf_forward.1} parent=81 // pred_fallthru
          _
        %v456 = vld [vmem:[%s2] sm:$0xff]
        %v457 = vld [vmem:[%s2 + $0x8] sm:$0xff]
        %v458 = vld [vmem:[%s2 + $0x10] sm:$0xff]
        %v459 = vld [vmem:[%s2 + $0x18] sm:$0xff]
        %v460 = vld [vmem:[%s2 + $0x20] sm:$0xff]
        %v461 = vld [vmem:[%s2 + $0x28] sm:$0xff]
        %v462 = vld [vmem:[%s3] sm:$0xff]
        %v463 = vld [vmem:[%s3 + $0x8] sm:$0xff]
        %v464 = vld [vmem:[%s3 + $0x10] sm:$0xff]
        %v465 = vld [vmem:[%s3 + $0x18] sm:$0xff]
        %v466 = vld [vmem:[%s3 + $0x20] sm:$0xff]
        %v467 = vld [vmem:[%s3 + $0x28] sm:$0xff]
        %v468 = vld [vmem:[%s3 + $0x30] sm:$0xff]
        %v469 = vld [vmem:[%s3 + $0x38] sm:$0xff]
        %v470 = vld [vmem:[%s3 + $0x40] sm:$0xff]
        %v471 = vld [vmem:[%s3 + $0x48] sm:$0xff]
        %v472 = vld [vmem:[%s3 + $0x50] sm:$0xff]
        %v473 = vld [vmem:[%s3 + $0x58] sm:$0xff]
        %v474 = vld [vmem:[%s3 + $0x60] sm:$0xff]
        %v475 = vld [vmem:[%s3 + $0x68] sm:$0xff]
        %v476 = vld [vmem:[%s3 + $0x70] sm:$0xff]
        %v477 = vld [vmem:[%s3 + $0x78] sm:$0xff]
        %v478 = vld [vmem:[%s3 + $0x80] sm:$0xff]
        %v479 = vld [vmem:[%s3 + $0x88] sm:$0xff]
        %v480 = vld [vmem:[%s4] sm:$0xff]
        %v481 = vld [vmem:[%s4 + $0x8] sm:$0xff]
        %v482 = vld [vmem:[%s4 + $0x10] sm:$0xff]
        %v483 = vld [vmem:[%s4 + $0x18] sm:$0xff]
        %v484 = vld [vmem:[%s4 + $0x20] sm:$0xff]
        %v485 = vld [vmem:[%s4 + $0x28] sm:$0xff]
        %v486 = vld [vmem:[%s4 + $0x30] sm:$0xff]
        %v487 = vld [vmem:[%s4 + $0x38] sm:$0xff]
        %v488 = vld [vmem:[%s4 + $0x40] sm:$0xff]
        %v489 = vld [vmem:[%s4 + $0x48] sm:$0xff]
        %v490 = vld [vmem:[%s4 + $0x50] sm:$0xff]
        %v491 = vld [vmem:[%s4 + $0x58] sm:$0xff]
        %v492 = vld [vmem:[%s4 + $0x60] sm:$0xff]
        %v493 = vld [vmem:[%s4 + $0x68] sm:$0xff]
        %v494 = vld [vmem:[%s4 + $0x70] sm:$0xff]
        %v495 = vld [vmem:[%s4 + $0x78] sm:$0xff]
        %v496 = vld [vmem:[%s4 + $0x80] sm:$0xff]
        %v497 = vld [vmem:[%s4 + $0x88] sm:$0xff]
        %v498 = vld [vmem:[%s5] sm:$0xff]
        %v499 = vld [vmem:[%s5 + $0x8] sm:$0xff]
        %v500 = vld [vmem:[%s5 + $0x10] sm:$0xff]
        %v501 = vld [vmem:[%s5 + $0x18] sm:$0xff]
        %v502 = vld [vmem:[%s5 + $0x20] sm:$0xff]
        %v503 = vld [vmem:[%s5 + $0x28] sm:$0xff]
        %v504 = vld [vmem:[%s6] sm:$0xff]
        %506 = vset.pattern.permute.xlu0 24
        %507 = vperm.xlu0 %506, %v504
        %v508 = vpop.permute.xlu0 %507
        %v510 = vld [vmem:[%s7] sm:$0x1]
        %v512 = vlaneseq
        %v513 = vshrl.u32 %v512, 7
        %v514 = vsub.s32 0, %v513
        %v515 = vrot.slane %v510, %v514
        %516 = vset.pattern.permute.xlu0 0
        %517 = vperm.xlu0 %516, %v515
        %v518 = vpop.permute.xlu0 %517
        %520 = vset.pattern.permute.xlu0 1
        %521 = vperm.xlu0 %520, %v515
        %v522 = vpop.permute.xlu0 %521
        loop: start=0, step=1, limit=16
        $region91: #{nkf_forward.1} parent=81 // loop_pre_header
          _
        $region92: #{nkf_forward.1} parent=81 // loop_header
          %s525 = sphi 0, %s529
          %p526 = scmp.ge.s32.totalorder %s525, 16
        $region93: #{nkf_forward.1} parent=81 // loop_header_branch
          %528 = sbr.rel (%p526) target = $region97
        $region94: #{nkf_forward.1} parent=81 // loop_body
          %s530 = smul.u32 %s525, 8
          %s531 = scalar_lea.vmem %s395, %s530 [#allocation11]
          %v532 = vld [vmem:[%s531] sm:$0xff]
          %v533 = vld [vmem:[#allocation2] sm:$0xf]
          %v535 = vrot.slane %v533, 1
          %v538 = vrot.slane %v532, 5
          %vm540 = vcmask 1042432
          %v541 = vsel %vm540, %v535, %v538
          %v542 = vld [vmem:[#allocation3] sm:$0xf]
          %v544 = vrot.slane %v542, 1
          %v546 = vrot.slane %v532, 6
          %v548 = vsel %vm540, %v544, %v546
          %549 = vst [vmem:[#allocation2] sm:$0xf] %v541
          %550 = vst [vmem:[#allocation3] sm:$0xf] %v548
          %s551 = smul.u32 %s32, 16
          %s552 = sadd.s32 %s551, %s525
          %s553 = sld [smem:[#allocation10 + %s552]]
          %p554 = scmp.ne.s32.totalorder %s553, 0
          // Predicated region
          $region98: #{nkf_forward.1} parent=94 // pred_check
            %p555 = pneg %p554
          $region99: #{nkf_forward.1} parent=94 // pred_check_branch
            %557 = sbr.rel (%p555) target = $region101
          $region100: #{nkf_forward.1} parent=94 // pred_region
            %v558 = vld [vmem:[#allocation6] sm:$0xf]
            %v559 = vld [vmem:[#allocation7] sm:$0xf]
            %v560 = vld [vmem:[#allocation4] sm:$0xf]
            %v561 = vsub.f32 %v558, %v560
            %v562 = vld [vmem:[#allocation5] sm:$0xf]
            %v563 = vsub.f32 %v559, %v562
            %564 = vst [vmem:[#allocation4] sm:$0xf] %v558
            %565 = vst [vmem:[#allocation5] sm:$0xf] %v559
            %v566 = vmul.f32 %v541, %v558
            %v567 = vmul.f32 %v548, %v559
            %v568 = vsub.f32 %v566, %v567
            %vm569 = vcmask 1043456
            %v570 = vsel %vm569, %v568, 0.0
            %v571 = vrot.slane %v570, 4
            %v572 = vadd.f32 %v570, %v571
            %v573 = vrot.slane %v572, 2
            %v574 = vadd.f32 %v572, %v573
            %v575 = vrot.slane %v574, 1
            %v576 = vadd.f32 %v574, %v575
            %v577 = vmul.f32 %v541, %v559
            %v578 = vmul.f32 %v548, %v558
            %v579 = vadd.f32 %v577, %v578
            %v580 = vsel %vm569, %v579, 0.0
            %v581 = vrot.slane %v580, 4
            %v582 = vadd.f32 %v580, %v581
            %v583 = vrot.slane %v582, 2
            %v584 = vadd.f32 %v582, %v583
            %v585 = vrot.slane %v584, 1
            %v586 = vadd.f32 %v584, %v585
            %v587 = vsub.f32 %v532, %v576
            %v588 = vsub.f32 %v532, %v586
            %v590 = vrot.slane %v561, 4
            %v593 = vrot.slane %v587, 2
            %v595 = vsel %vm569, %v541, %v590
            %vm596 = vcmask 1040384
            %v597 = vsel %vm596, %v593, 1.0
            %v599 = vrot.slane %v563, 4
            %v602 = vrot.slane %v588, 3
            %v604 = vsel %vm569, %v548, %v599
            %v605 = vsel %vm596, %v602, 1.0
            %vm606 = vcmask 80896
            %v608 = vsel %vm606, %v456, 0
            %v611 = vsel %vm606, %v457, 0
            %v614 = vsel %vm606, %v458, 0
            %v617 = vsel %vm606, %v459, 0
            %v620 = vsel %vm606, %v460, 0
            %v623 = vsel %vm606, %v461, 0
            %vm625 = vcmask 1041408
            %v627 = vsel %vm625, %v597, 0
            %v630 = vsel %vm625, %v605, 0
            %632 = vmatprep.subr.mxu0 %v604
            %633 = vmatpush1.msra.mxu0 %v595
            %634 = vmatprep.subr.mxu0 %v630
            %635 = vmatpush1.msra.mxu0 %v627
            %636 = vmatprep.subr.mxu0 0.0
            %637 = vmatpush1.msra.mxu0 0.0
            %638 = vmatprep.subr.mxu0 0.0
            %639 = vmatpush1.msra.mxu0 0.0
            %640 = vmatprep.subr.mxu0 0.0
            %641 = vmatpush1.msra.mxu0 0.0
            %642 = vmatprep.subr.mxu0 0.0
            %643 = vmatpush1.msra.mxu0 0.0
            %644 = vmatprep.subr.mxu0 0.0
            %645 = vmatpush1.msra.mxu0 0.0
            %646 = vmatprep.subr.mxu0 0.0
            %647 = vmatpush1.msra.mxu0 0.0
            %648 = vmatprep.subr.mxu0 0.0
            %649 = vmatpush1.msra.mxu0 0.0
            %650 = vmatprep.subr.mxu0 0.0
            %651 = vmatpush1.msra.mxu0 0.0
            %652 = vmatprep.subr.mxu0 0.0
            %653 = vmatpush1.msra.mxu0 0.0
            %654 = vmatprep.subr.mxu0 0.0
            %655 = vmatpush1.msra.mxu0 0.0
            %656 = vmatprep.subr.mxu0 0.0
            %657 = vmatpush1.msra.mxu0 0.0
            %658 = vmatprep.subr.mxu0 0.0
            %659 = vmatpush1.msra.mxu0 0.0
            %660 = vmatprep.subr.mxu0 0.0
            %661 = vmatpush1.msra.mxu0 0.0
            %662 = vmatprep.subr.mxu0 0.0
            %663 = vmatpush1.msra.mxu0 0.0
            %664 = vmatprep.subr.mxu0 0.0
            %665 = vmatpush1.msra.mxu0 0.0
            %666 = vmatprep.subr.mxu0 0.0
            %667 = vmatpush1.msra.mxu0 0.0
            %668 = vmatprep.subr.mxu0 0.0
            %669 = vmatpush1.msra.mxu0 0.0
            %670 = vmatprep.subr.mxu0 0.0
            %671 = vmatpush1.msra.mxu0 0.0
            %672 = vmatprep.subr.mxu0 0.0
            %673 = vmatpush1.msra.mxu0 0.0
            %674 = vmatprep.subr.mxu0 0.0
            %675 = vmatpush1.msra.mxu0 0.0
            %676 = vmatprep.subr.mxu0 0.0
            %677 = vmatpush1.msra.mxu0 0.0
            %678 = vmatprep.subr.mxu0 0.0
            %679 = vmatpush1.msra.mxu0 0.0
            %680 = vmatprep.subr.mxu0 0.0
            %681 = vmatpush1.msra.mxu0 0.0
            %682 = vmatprep.subr.mxu0 0.0
            %683 = vmatpush1.msra.mxu0 0.0
            %684 = vmatprep.subr.mxu0 0.0
            %685 = vmatpush1.msra.mxu0 0.0
            %686 = vmatprep.subr.mxu0 0.0
            %687 = vmatpush1.msra.mxu0 0.0
            %688 = vmatprep.subr.mxu0 0.0
            %689 = vmatpush1.msra.mxu0 0.0
            %690 = vmatprep.subr.mxu0 0.0
            %691 = vmatpush1.msra.mxu0 0.0
            %692 = vmatprep.subr.mxu0 0.0
            %693 = vmatpush1.msra.mxu0 0.0
            %694 = vmatprep.subr.mxu0 0.0
            %695 = vmatpush1.msra.mxu0 0.0
            %696 = vmatprep.mubr.f32.mxu0 0.0
            %697 = vmatmul.mubr.f32.gmra.mrb[0].mxu0 %v608
            %v698 = vpop.f32.mrb[0].mxu0
            %v699 = vadd.f32 0.0, %v698
            %v700 = vpop.f32.mrb[0].mxu0
            %701 = vmatprep.mubr.f32.mxu0 0.0
            %702 = vmatmul.mubr.f32.gmra.mrb[0].mxu0 %v611
            %v703 = vpop.f32.mrb[0].mxu0
            %v704 = vadd.f32 0.0, %v703
            %v705 = vpop.f32.mrb[0].mxu0
            %706 = vmatprep.mubr.f32.mxu0 0.0
            %707 = vmatmul.mubr.f32.gmra.mrb[0].mxu0 %v614
            %v708 = vpop.f32.mrb[0].mxu0
            %v709 = vadd.f32 0.0, %v708
            %v710 = vpop.f32.mrb[0].mxu0
            %711 = vmatprep.mubr.f32.mxu0 0.0
            %712 = vmatmul.mubr.f32.gmra.mrb[0].mxu0 %v617
            %v713 = vpop.f32.mrb[0].mxu0
            %v714 = vpop.f32.mrb[0].mxu0
            %v715 = vadd.f32 0.0, %v714
            %716 = vmatprep.mubr.f32.mxu0 0.0
            %717 = vmatmul.mubr.f32.gmra.mrb[0].mxu0 %v620
            %v718 = vpop.f32.mrb[0].mxu0
            %v719 = vpop.f32.mrb[0].mxu0
            %v720 = vadd.f32 0.0, %v719
            %721 = vmatprep.mubr.f32.mxu0 0.0
            %722 = vmatmul.mubr.f32.gmra.mrb[0].mxu0 %v623
            %v723 = vpop.f32.mrb[0].mxu0
            %v724 = vpop.f32.mrb[0].mxu0
            %v725 = vadd.f32 0.0, %v724
            %726 = vdwg.mxu0
            %vm727 = vcmp.ge.f32.partialorder %v699, 0.0
            %vm728 = vcmp.ge.f32.partialorder %v715, 0.0
            %vm729 = vcmp.ge.f32.partialorder %v704, 0.0
            %vm730 = vcmp.ge.f32.partialorder %v720, 0.0
            %vm731 = vcmp.ge.f32.partialorder %v709, 0.0
            %vm732 = vcmp.ge.f32.partialorder %v725, 0.0
            %v733 = vmul.f32 %v518, %v699
            %v734 = vmul.f32 %v518, %v715
            %v735 = vmul.f32 %v518, %v704
            %v736 = vmul.f32 %v518, %v720
            %v737 = vmul.f32 %v518, %v709
            %v738 = vmul.f32 %v518, %v725
            %v739 = vsel %vm727, %v699, %v733
            %v740 = vsel %vm728, %v715, %v734
            %v741 = vsel %vm729, %v704, %v735
            %v742 = vsel %vm730, %v720, %v736
            %v743 = vsel %vm731, %v709, %v737
            %v744 = vsel %vm732, %v725, %v738
            %v745 = vld [vmem:[#allocation8] sm:$0xff]
            %v746 = vld [vmem:[#allocation8 + $0x8] sm:$0xff]
            %v747 = vld [vmem:[#allocation8 + $0x10] sm:$0xff]
            %v748 = vld [vmem:[#allocation8 + $0x18] sm:$0xff]
            %v749 = vld [vmem:[#allocation8 + $0x20] sm:$0xff]
            %v750 = vld [vmem:[#allocation8 + $0x28] sm:$0xff]
            %v751 = vld [vmem:[#allocation8 + $0x30] sm:$0xff]
            %v752 = vld [vmem:[#allocation8 + $0x38] sm:$0xff]
            %v753 = vld [vmem:[#allocation8 + $0x40] sm:$0xff]
            %v754 = vld [vmem:[#allocation8 + $0x48] sm:$0xff]
            %v755 = vld [vmem:[#allocation8 + $0x50] sm:$0xff]
            %v756 = vld [vmem:[#allocation8 + $0x58] sm:$0xff]
            %v757 = vld [vmem:[#allocation8 + $0x60] sm:$0x1]
            %v758 = vld [vmem:[#allocation8 + $0x68] sm:$0x1]
            %vm759 = vcmask 203776
            %v761 = vsel %vm759, %v462, 0
            %v764 = vsel %vm759, %v463, 0
            %v767 = vsel %vm759, %v464, 0
            %v770 = vsel %vm759, %v465, 0
            %v773 = vsel %vm759, %v466, 0
            %v776 = vsel %vm759, %v467, 0
            %v779 = vsel %vm759, %v468, 0
            %v782 = vsel %vm759, %v469, 0
            %v785 = vsel %vm759, %v470, 0
            %v788 = vsel %vm759, %v471, 0
            %v791 = vsel %vm759, %v472, 0
            %v794 = vsel %vm759, %v473, 0
            %v797 = vsel %vm759, %v474, 0
            %v800 = vsel %vm759, %v475, 0
            %v803 = vsel %vm759, %v476, 0
            %v806 = vsel %vm759, %v477, 0
            %v809 = vsel %vm759, %v478, 0
            %v812 = vsel %vm759, %v479, 0
            %v815 = vsel %vm596, 1.0, 0
            %817 = vmatprep.subr.mxu0 %v740
            %818 = vmatpush1.msra.mxu0 %v739
            %819 = vmatprep.subr.mxu0 %v742
            %820 = vmatpush1.msra.mxu0 %v741
            %821 = vmatprep.subr.mxu0 %v744
            %822 = vmatpush1.msra.mxu0 %v743
            %823 = vmatprep.subr.mxu0 %v815
            %824 = vmatpush1.msra.mxu0 %v815
            %825 = vmatprep.subr.mxu0 0.0
            %826 = vmatpush1.msra.mxu0 0.0
            %827 = vmatprep.subr.mxu0 0.0
            %828 = vmatpush1.msra.mxu0 0.0
            %829 = vmatprep.subr.mxu0 0.0
            %830 = vmatpush1.msra.mxu0 0.0
            %831 = vmatprep.subr.mxu0 0.0
            %832 = vmatpush1.msra.mxu0 0.0
            %833 = vmatprep.subr.mxu0 0.0
            %834 = vmatpush1.msra.mxu0 0.0
            %835 = vmatprep.subr.mxu0 0.0
            %836 = vmatpush1.msra.mxu0 0.0
            %837 = vmatprep.subr.mxu0 0.0
            %838 = vmatpush1.msra.mxu0 0.0
            %839 = vmatprep.subr.mxu0 0.0
            %840 = vmatpush1.msra.mxu0 0.0
            %841 = vmatprep.subr.mxu0 0.0
            %842 = vmatpush1.msra.mxu0 0.0
            %843 = vmatprep.subr.mxu0 0.0
            %844 = vmatpush1.msra.mxu0 0.0
            %845 = vmatprep.subr.mxu0 0.0
            %846 = vmatpush1.msra.mxu0 0.0
            %847 = vmatprep.subr.mxu0 0.0
            %848 = vmatpush1.msra.mxu0 0.0
            %849 = vmatprep.subr.mxu0 0.0
            %850 = vmatpush1.msra.mxu0 0.0
            %851 = vmatprep.subr.mxu0 0.0
            %852 = vmatpush1.msra.mxu0 0.0
            %853 = vmatprep.subr.mxu0 0.0
            %854 = vmatpush1.msra.mxu0 0.0
            %855 = vmatprep.subr.mxu0 0.0
            %856 = vmatpush1.msra.mxu0 0.0
            %857 = vmatprep.subr.mxu0 0.0
            %858 = vmatpush1.msra.mxu0 0.0
            %859 = vmatprep.subr.mxu0 0.0
            %860 = vmatpush1.msra.mxu0 0.0
            %861 = vmatprep.subr.mxu0 0.0
            %862 = vmatpush1.msra.mxu0 0.0
            %863 = vmatprep.subr.mxu0 0.0
            %864 = vmatpush1.msra.mxu0 0.0
            %865 = vmatprep.subr.mxu0 0.0
            %866 = vmatpush1.msra.mxu0 0.0
            %867 = vmatprep.subr.mxu0 0.0
            %868 = vmatpush1.msra.mxu0 0.0
            %869 = vmatprep.subr.mxu0 0.0
            %870 = vmatpush1.msra.mxu0 0.0
            %871 = vmatprep.subr.mxu0 0.0
            %872 = vmatpush1.msra.mxu0 0.0
            %873 = vmatprep.subr.mxu0 0.0
            %874 = vmatpush1.msra.mxu0 0.0
            %875 = vmatprep.subr.mxu0 0.0
            %876 = vmatpush1.msra.mxu0 0.0
            %877 = vmatprep.subr.mxu0 0.0
            %878 = vmatpush1.msra.mxu0 0.0
            %879 = vmatprep.subr.mxu0 0.0
            %880 = vmatpush1.msra.mxu0 0.0
            %881 = vmatprep.mubr.f32.mxu0 0.0
            %882 = vmatmul.mubr.f32.gmra.mrb[0].mxu0 %v761
            %v883 = vpop.f32.mrb[0].mxu0
            %v884 = vadd.f32 0.0, %v883
            %v885 = vpop.f32.mrb[0].mxu0
            %v886 = vadd.f32 0.0, %v885
            %887 = vmatprep.mubr.f32.mxu0 0.0
            %888 = vmatmul.mubr.f32.gmra.mrb[0].mxu0 %v764
            %v889 = vpop.f32.mrb[0].mxu0
            %v890 = vadd.f32 0.0, %v889
            %v891 = vpop.f32.mrb[0].mxu0
            %v892 = vadd.f32 0.0, %v891
            %893 = vmatprep.mubr.f32.mxu0 0.0
            %894 = vmatmul.mubr.f32.gmra.mrb[0].mxu0 %v767
            %v895 = vpop.f32.mrb[0].mxu0
            %v896 = vadd.f32 0.0, %v895
            %v897 = vpop.f32.mrb[0].mxu0
            %v898 = vadd.f32 0.0, %v897
            %899 = vmatprep.mubr.f32.mxu0 0.0
            %900 = vmatmul.mubr.f32.gmra.mrb[0].mxu0 %v770
            %v901 = vpop.f32.mrb[0].mxu0
            %v902 = vadd.f32 0.0, %v901
            %v903 = vpop.f32.mrb[0].mxu0
            %v904 = vadd.f32 0.0, %v903
            %905 = vmatprep.mubr.f32.mxu0 0.0
            %906 = vmatmul.mubr.f32.gmra.mrb[0].mxu0 %v773
            %v907 = vpop.f32.mrb[0].mxu0
            %v908 = vadd.f32 0.0, %v907
            %v909 = vpop.f32.mrb[0].mxu0
            %v910 = vadd.f32 0.0, %v909
            %911 = vmatprep.mubr.f32.mxu0 0.0
            %912 = vmatmul.mubr.f32.gmra.mrb[0].mxu0 %v776
            %v913 = vpop.f32.mrb[0].mxu0
            %v914 = vadd.f32 0.0, %v913
            %v915 = vpop.f32.mrb[0].mxu0
            %v916 = vadd.f32 0.0, %v915
            %917 = vmatprep.mubr.f32.mxu0 0.0
            %918 = vmatmul.mubr.f32.gmra.mrb[0].mxu0 %v779
            %v919 = vpop.f32.mrb[0].mxu0
            %v920 = vadd.f32 0.0, %v919
            %v921 = vpop.f32.mrb[0].mxu0
            %v922 = vadd.f32 0.0, %v921
            %923 = vmatprep.mubr.f32.mxu0 0.0
            %924 = vmatmul.mubr.f32.gmra.mrb[0].mxu0 %v782
            %v925 = vpop.f32.mrb[0].mxu0
            %v926 = vadd.f32 0.0, %v925
            %v927 = vpop.f32.mrb[0].mxu0
            %v928 = vadd.f32 0.0, %v927
            %929 = vmatprep.mubr.f32.mxu0 0.0
            %930 = vmatmul.mubr.f32.gmra.mrb[0].mxu0 %v785
            %v931 = vpop.f32.mrb[0].mxu0
            %v932 = vadd.f32 0.0, %v931
            %v933 = vpop.f32.mrb[0].mxu0
            %v934 = vadd.f32 0.0, %v933
            %935 = vmatprep.mubr.f32.mxu0 0.0
            %936 = vmatmul.mubr.f32.gmra.mrb[0].mxu0 %v788
            %v937 = vpop.f32.mrb[0].mxu0
            %v938 = vadd.f32 0.0, %v937
            %v939 = vpop.f32.mrb[0].mxu0
            %v940 = vadd.f32 0.0, %v939
            %941 = vmatprep.mubr.f32.mxu0 0.0
            %942 = vmatmul.mubr.f32.gmra.mrb[0].mxu0 %v791
            %v943 = vpop.f32.mrb[0].mxu0
            %v944 = vadd.f32 0.0, %v943
            %v945 = vpop.f32.mrb[0].mxu0
            %v946 = vadd.f32 0.0, %v945
            %947 = vmatprep.mubr.f32.mxu0 0.0
            %948 = vmatmul.mubr.f32.gmra.mrb[0].mxu0 %v794
            %v949 = vpop.f32.mrb[0].mxu0
            %v950 = vadd.f32 0.0, %v949
            %v951 = vpop.f32.mrb[0].mxu0
            %v952 = vadd.f32 0.0, %v951
            %953 = vmatprep.mubr.f32.mxu0 0.0
            %954 = vmatmul.mubr.f32.gmra.mrb[0].mxu0 %v797
            %v955 = vpop.f32.mrb[0].mxu0
            %v956 = vadd.f32 0.0, %v955
            %v957 = vpop.f32.mrb[0].mxu0
            %v958 = vadd.f32 0.0, %v957
            %959 = vmatprep.mubr.f32.mxu0 0.0
            %960 = vmatmul.mubr.f32.gmra.mrb[0].mxu0 %v800
            %v961 = vpop.f32.mrb[0].mxu0
            %v962 = vadd.f32 0.0, %v961
            %v963 = vpop.f32.mrb[0].mxu0
            %v964 = vadd.f32 0.0, %v963
            %965 = vmatprep.mubr.f32.mxu0 0.0
            %966 = vmatmul.mubr.f32.gmra.mrb[0].mxu0 %v803
            %v967 = vpop.f32.mrb[0].mxu0
            %v968 = vadd.f32 0.0, %v967
            %v969 = vpop.f32.mrb[0].mxu0
            %v970 = vadd.f32 0.0, %v969
            %971 = vmatprep.mubr.f32.mxu0 0.0
            %972 = vmatmul.mubr.f32.gmra.mrb[0].mxu0 %v806
            %v973 = vpop.f32.mrb[0].mxu0
            %v974 = vadd.f32 0.0, %v973
            %v975 = vpop.f32.mrb[0].mxu0
            %v976 = vadd.f32 0.0, %v975
            %977 = vmatprep.mubr.f32.mxu0 0.0
            %978 = vmatmul.mubr.f32.gmra.mrb[0].mxu0 %v809
            %v979 = vpop.f32.mrb[0].mxu0
            %v980 = vadd.f32 0.0, %v979
            %v981 = vpop.f32.mrb[0].mxu0
            %v982 = vadd.f32 0.0, %v981
            %983 = vmatprep.mubr.f32.mxu0 0.0
            %984 = vmatmul.mubr.f32.gmra.mrb[0].mxu0 %v812
            %v985 = vpop.f32.mrb[0].mxu0
            %v986 = vadd.f32 0.0, %v985
            %v987 = vpop.f32.mrb[0].mxu0
            %v988 = vadd.f32 0.0, %v987
            %989 = vdwg.mxu0
            %vm990 = vcmask 400384
            %v992 = vsel %vm990, %v480, 0
            %v995 = vsel %vm990, %v481, 0
            %v998 = vsel %vm990, %v482, 0
            %v1001 = vsel %vm990, %v483, 0
            %v1004 = vsel %vm990, %v484, 0
            %v1007 = vsel %vm990, %v485, 0
            %v1010 = vsel %vm990, %v486, 0
            %v1013 = vsel %vm990, %v487, 0
            %v1016 = vsel %vm990, %v488, 0
            %v1019 = vsel %vm990, %v489, 0
            %v1022 = vsel %vm990, %v490, 0
            %v1025 = vsel %vm990, %v491, 0
            %v1028 = vsel %vm990, %v492, 0
            %v1031 = vsel %vm990, %v493, 0
            %v1034 = vsel %vm990, %v494, 0
            %v1037 = vsel %vm990, %v495, 0
            %v1040 = vsel %vm990, %v496, 0
            %v1043 = vsel %vm990, %v497, 0
            %v1046 = vsel %vm596, %v757, 0
            %v1049 = vsel %vm596, %v758, 0
            %1051 = vmatprep.subr.mxu0 %v746
            %1052 = vmatpush1.msra.mxu0 %v745
            %1053 = vmatprep.subr.mxu0 %v748
            %1054 = vmatpush1.msra.mxu0 %v747
            %1055 = vmatprep.subr.mxu0 %v750
            %1056 = vmatpush1.msra.mxu0 %v749
            %1057 = vmatprep.subr.mxu0 %v752
            %1058 = vmatpush1.msra.mxu0 %v751
            %1059 = vmatprep.subr.mxu0 %v754
            %1060 = vmatpush1.msra.mxu0 %v753
            %1061 = vmatprep.subr.mxu0 %v756
            %1062 = vmatpush1.msra.mxu0 %v755
            %1063 = vmatprep.subr.mxu0 %v1049
            %1064 = vmatpush1.msra.mxu0 %v1046
            %1065 = vmatprep.subr.mxu0 0.0
            %1066 = vmatpush1.msra.mxu0 0.0
            %1067 = vmatprep.subr.mxu0 0.0
            %1068 = vmatpush1.msra.mxu0 0.0
            %1069 = vmatprep.subr.mxu0 0.0
            %1070 = vmatpush1.msra.mxu0 0.0
            %1071 = vmatprep.subr.mxu0 0.0
            %1072 = vmatpush1.msra.mxu0 0.0
            %1073 = vmatprep.subr.mxu0 0.0
            %1074 = vmatpush1.msra.mxu0 0.0
            %1075 = vmatprep.subr.mxu0 0.0
            %1076 = vmatpush1.msra.mxu0 0.0
            %1077 = vmatprep.subr.mxu0 0.0
            %1078 = vmatpush1.msra.mxu0 0.0
            %1079 = vmatprep.subr.mxu0 0.0
            %1080 = vmatpush1.msra.mxu0 0.0
            %1081 = vmatprep.subr.mxu0 0.0
            %1082 = vmatpush1.msra.mxu0 0.0
            %1083 = vmatprep.subr.mxu0 0.0
            %1084 = vmatpush1.msra.mxu0 0.0
            %1085 = vmatprep.subr.mxu0 0.0
            %1086 = vmatpush1.msra.mxu0 0.0
            %1087 = vmatprep.subr.mxu0 0.0
            %1088 = vmatpush1.msra.mxu0 0.0
            %1089 = vmatprep.subr.mxu0 0.0
            %1090 = vmatpush1.msra.mxu0 0.0
            %1091 = vmatprep.subr.mxu0 0.0
            %1092 = vmatpush1.msra.mxu0 0.0
            %1093 = vmatprep.subr.mxu0 0.0
            %1094 = vmatpush1.msra.mxu0 0.0
            %1095 = vmatprep.subr.mxu0 0.0
            %1096 = vmatpush1.msra.mxu0 0.0
            %1097 = vmatprep.subr.mxu0 0.0
            %1098 = vmatpush1.msra.mxu0 0.0
            %1099 = vmatprep.subr.mxu0 0.0
            %1100 = vmatpush1.msra.mxu0 0.0
            %1101 = vmatprep.subr.mxu0 0.0
            %1102 = vmatpush1.msra.mxu0 0.0
            %1103 = vmatprep.subr.mxu0 0.0
            %1104 = vmatpush1.msra.mxu0 0.0
            %1105 = vmatprep.subr.mxu0 0.0
            %1106 = vmatpush1.msra.mxu0 0.0
            %1107 = vmatprep.subr.mxu0 0.0
            %1108 = vmatpush1.msra.mxu0 0.0
            %1109 = vmatprep.subr.mxu0 0.0
            %1110 = vmatpush1.msra.mxu0 0.0
            %1111 = vmatprep.subr.mxu0 0.0
            %1112 = vmatpush1.msra.mxu0 0.0
            %1113 = vmatprep.subr.mxu0 0.0
            %1114 = vmatpush1.msra.mxu0 0.0
            %1115 = vmatprep.mubr.f32.mxu0 0.0
            %1116 = vmatmul.mubr.f32.gmra.mrb[0].mxu0 %v992
            %v1117 = vpop.f32.mrb[0].mxu0
            %v1118 = vadd.f32 0.0, %v1117
            %v1119 = vpop.f32.mrb[0].mxu0
            %v1120 = vadd.f32 0.0, %v1119
            %1121 = vmatprep.mubr.f32.mxu0 0.0
            %1122 = vmatmul.mubr.f32.gmra.mrb[0].mxu0 %v995
            %v1123 = vpop.f32.mrb[0].mxu0
            %v1124 = vadd.f32 0.0, %v1123
            %v1125 = vpop.f32.mrb[0].mxu0
            %v1126 = vadd.f32 0.0, %v1125
            %1127 = vmatprep.mubr.f32.mxu0 0.0
            %1128 = vmatmul.mubr.f32.gmra.mrb[0].mxu0 %v998
            %v1129 = vpop.f32.mrb[0].mxu0
            %v1130 = vadd.f32 0.0, %v1129
            %v1131 = vpop.f32.mrb[0].mxu0
            %v1132 = vadd.f32 0.0, %v1131
            %1133 = vmatprep.mubr.f32.mxu0 0.0
            %1134 = vmatmul.mubr.f32.gmra.mrb[0].mxu0 %v1001
            %v1135 = vpop.f32.mrb[0].mxu0
            %v1136 = vadd.f32 0.0, %v1135
            %v1137 = vpop.f32.mrb[0].mxu0
            %v1138 = vadd.f32 0.0, %v1137
            %1139 = vmatprep.mubr.f32.mxu0 0.0
            %1140 = vmatmul.mubr.f32.gmra.mrb[0].mxu0 %v1004
            %v1141 = vpop.f32.mrb[0].mxu0
            %v1142 = vadd.f32 0.0, %v1141
            %v1143 = vpop.f32.mrb[0].mxu0
            %v1144 = vadd.f32 0.0, %v1143
            %1145 = vmatprep.mubr.f32.mxu0 0.0
            %1146 = vmatmul.mubr.f32.gmra.mrb[0].mxu0 %v1007
            %v1147 = vpop.f32.mrb[0].mxu0
            %v1148 = vadd.f32 0.0, %v1147
            %v1149 = vpop.f32.mrb[0].mxu0
            %v1150 = vadd.f32 0.0, %v1149
            %1151 = vmatprep.mubr.f32.mxu0 0.0
            %1152 = vmatmul.mubr.f32.gmra.mrb[0].mxu0 %v1010
            %v1153 = vpop.f32.mrb[0].mxu0
            %v1154 = vadd.f32 0.0, %v1153
            %v1155 = vpop.f32.mrb[0].mxu0
            %v1156 = vadd.f32 0.0, %v1155
            %1157 = vmatprep.mubr.f32.mxu0 0.0
            %1158 = vmatmul.mubr.f32.gmra.mrb[0].mxu0 %v1013
            %v1159 = vpop.f32.mrb[0].mxu0
            %v1160 = vadd.f32 0.0, %v1159
            %v1161 = vpop.f32.mrb[0].mxu0
            %v1162 = vadd.f32 0.0, %v1161
            %1163 = vmatprep.mubr.f32.mxu0 0.0
            %1164 = vmatmul.mubr.f32.gmra.mrb[0].mxu0 %v1016
            %v1165 = vpop.f32.mrb[0].mxu0
            %v1166 = vadd.f32 0.0, %v1165
            %v1167 = vpop.f32.mrb[0].mxu0
            %v1168 = vadd.f32 0.0, %v1167
            %1169 = vmatprep.mubr.f32.mxu0 0.0
            %1170 = vmatmul.mubr.f32.gmra.mrb[0].mxu0 %v1019
            %v1171 = vpop.f32.mrb[0].mxu0
            %v1172 = vadd.f32 0.0, %v1171
            %v1173 = vpop.f32.mrb[0].mxu0
            %v1174 = vadd.f32 0.0, %v1173
            %1175 = vmatprep.mubr.f32.mxu0 0.0
            %1176 = vmatmul.mubr.f32.gmra.mrb[0].mxu0 %v1022
            %v1177 = vpop.f32.mrb[0].mxu0
            %v1178 = vadd.f32 0.0, %v1177
            %v1179 = vpop.f32.mrb[0].mxu0
            %v1180 = vadd.f32 0.0, %v1179
            %1181 = vmatprep.mubr.f32.mxu0 0.0
            %1182 = vmatmul.mubr.f32.gmra.mrb[0].mxu0 %v1025
            %v1183 = vpop.f32.mrb[0].mxu0
            %v1184 = vadd.f32 0.0, %v1183
            %v1185 = vpop.f32.mrb[0].mxu0
            %v1186 = vadd.f32 0.0, %v1185
            %1187 = vmatprep.mubr.f32.mxu0 0.0
            %1188 = vmatmul.mubr.f32.gmra.mrb[0].mxu0 %v1028
            %v1189 = vpop.f32.mrb[0].mxu0
            %v1190 = vadd.f32 0.0, %v1189
            %v1191 = vpop.f32.mrb[0].mxu0
            %v1192 = vadd.f32 0.0, %v1191
            %1193 = vmatprep.mubr.f32.mxu0 0.0
            %1194 = vmatmul.mubr.f32.gmra.mrb[0].mxu0 %v1031
            %v1195 = vpop.f32.mrb[0].mxu0
            %v1196 = vadd.f32 0.0, %v1195
            %v1197 = vpop.f32.mrb[0].mxu0
            %v1198 = vadd.f32 0.0, %v1197
            %1199 = vmatprep.mubr.f32.mxu0 0.0
            %1200 = vmatmul.mubr.f32.gmra.mrb[0].mxu0 %v1034
            %v1201 = vpop.f32.mrb[0].mxu0
            %v1202 = vadd.f32 0.0, %v1201
            %v1203 = vpop.f32.mrb[0].mxu0
            %v1204 = vadd.f32 0.0, %v1203
            %1205 = vmatprep.mubr.f32.mxu0 0.0
            %1206 = vmatmul.mubr.f32.gmra.mrb[0].mxu0 %v1037
            %v1207 = vpop.f32.mrb[0].mxu0
            %v1208 = vadd.f32 0.0, %v1207
            %v1209 = vpop.f32.mrb[0].mxu0
            %v1210 = vadd.f32 0.0, %v1209
            %1211 = vmatprep.mubr.f32.mxu0 0.0
            %1212 = vmatmul.mubr.f32.gmra.mrb[0].mxu0 %v1040
            %v1213 = vpop.f32.mrb[0].mxu0
            %v1214 = vadd.f32 0.0, %v1213
            %v1215 = vpop.f32.mrb[0].mxu0
            %v1216 = vadd.f32 0.0, %v1215
            %1217 = vmatprep.mubr.f32.mxu0 0.0
            %1218 = vmatmul.mubr.f32.gmra.mrb[0].mxu0 %v1043
            %v1219 = vpop.f32.mrb[0].mxu0
            %v1220 = vadd.f32 0.0, %v1219
            %v1221 = vpop.f32.mrb[0].mxu0
            %v1222 = vadd.f32 0.0, %v1221
            %1223 = vdwg.mxu0
            %v1224 = vadd.f32 %v884, %v1118
            %v1225 = vadd.f32 %v886, %v1120
            %v1226 = vadd.f32 %v890, %v1124
            %v1227 = vadd.f32 %v892, %v1126
            %v1228 = vadd.f32 %v896, %v1130
            %v1229 = vadd.f32 %v898, %v1132
            %v1230 = vadd.f32 %v902, %v1136
            %v1231 = vadd.f32 %v904, %v1138
            %v1232 = vadd.f32 %v908, %v1142
            %v1233 = vadd.f32 %v910, %v1144
            %v1234 = vadd.f32 %v914, %v1148
            %v1235 = vadd.f32 %v916, %v1150
            %v1236 = vxor.u32 %v1224, 2147483648
            %v1237 = vxor.u32 %v1225, 2147483648
            %v1238 = vxor.u32 %v1226, 2147483648
            %v1239 = vxor.u32 %v1227, 2147483648
            %v1240 = vxor.u32 %v1228, 2147483648
            %v1241 = vxor.u32 %v1229, 2147483648
            %v1242 = vxor.u32 %v1230, 2147483648
            %v1243 = vxor.u32 %v1231, 2147483648
            %v1244 = vxor.u32 %v1232, 2147483648
            %v1245 = vxor.u32 %v1233, 2147483648
            %v1246 = vxor.u32 %v1234, 2147483648
            %v1247 = vxor.u32 %v1235, 2147483648
            %v1248 = vmul.f32 %v1236, 1.442695
            %v1249 = vpow.pop %v1248
            %v1250 = vmul.f32 %v1237, 1.442695
            %v1251 = vpow.pop %v1250
            %v1252 = vmul.f32 %v1238, 1.442695
            %v1253 = vpow.pop %v1252
            %v1254 = vmul.f32 %v1239, 1.442695
            %v1255 = vpow.pop %v1254
            %v1256 = vmul.f32 %v1240, 1.442695
            %v1257 = vpow.pop %v1256
            %v1258 = vmul.f32 %v1241, 1.442695
            %v1259 = vpow.pop %v1258
            %v1260 = vmul.f32 %v1242, 1.442695
            %v1261 = vpow.pop %v1260
            %v1262 = vmul.f32 %v1243, 1.442695
            %v1263 = vpow.pop %v1262
            %v1264 = vmul.f32 %v1244, 1.442695
            %v1265 = vpow.pop %v1264
            %v1266 = vmul.f32 %v1245, 1.442695
            %v1267 = vpow.pop %v1266
            %v1268 = vmul.f32 %v1246, 1.442695
            %v1269 = vpow.pop %v1268
            %v1270 = vmul.f32 %v1247, 1.442695
            %v1271 = vpow.pop %v1270
            %v1272 = vadd.f32 %v1249, 1.0
            %v1273 = vadd.f32 %v1251, 1.0
            %v1274 = vadd.f32 %v1253, 1.0
            %v1275 = vadd.f32 %v1255, 1.0
            %v1276 = vadd.f32 %v1257, 1.0
            %v1277 = vadd.f32 %v1259, 1.0
            %v1278 = vadd.f32 %v1261, 1.0
            %v1279 = vadd.f32 %v1263, 1.0
            %v1280 = vadd.f32 %v1265, 1.0
            %v1281 = vadd.f32 %v1267, 1.0
            %v1282 = vadd.f32 %v1269, 1.0
            %v1283 = vadd.f32 %v1271, 1.0
            %v1284 = vrcp.pop %v1272
            %v1285 = vmul.f32 1.0, %v1284
            %v1286 = vrcp.pop %v1273
            %v1287 = vmul.f32 1.0, %v1286
            %v1288 = vrcp.pop %v1274
            %v1289 = vmul.f32 1.0, %v1288
            %v1290 = vrcp.pop %v1275
            %v1291 = vmul.f32 1.0, %v1290
            %v1292 = vrcp.pop %v1276
            %v1293 = vmul.f32 1.0, %v1292
            %v1294 = vrcp.pop %v1277
            %v1295 = vmul.f32 1.0, %v1294
            %v1296 = vrcp.pop %v1278
            %v1297 = vmul.f32 1.0, %v1296
            %v1298 = vrcp.pop %v1279
            %v1299 = vmul.f32 1.0, %v1298
            %v1300 = vrcp.pop %v1280
            %v1301 = vmul.f32 1.0, %v1300
            %v1302 = vrcp.pop %v1281
            %v1303 = vmul.f32 1.0, %v1302
            %v1304 = vrcp.pop %v1282
            %v1305 = vmul.f32 1.0, %v1304
            %v1306 = vrcp.pop %v1283
            %v1307 = vmul.f32 1.0, %v1306
            %v1308 = vadd.f32 %v920, %v1154
            %v1309 = vadd.f32 %v922, %v1156
            %v1310 = vadd.f32 %v926, %v1160
            %v1311 = vadd.f32 %v928, %v1162
            %v1312 = vadd.f32 %v932, %v1166
            %v1313 = vadd.f32 %v934, %v1168
            %v1314 = vadd.f32 %v938, %v1172
            %v1315 = vadd.f32 %v940, %v1174
            %v1316 = vadd.f32 %v944, %v1178
            %v1317 = vadd.f32 %v946, %v1180
            %v1318 = vadd.f32 %v950, %v1184
            %v1319 = vadd.f32 %v952, %v1186
            %v1320 = vxor.u32 %v1308, 2147483648
            %v1321 = vxor.u32 %v1309, 2147483648
            %v1322 = vxor.u32 %v1310, 2147483648
            %v1323 = vxor.u32 %v1311, 2147483648
            %v1324 = vxor.u32 %v1312, 2147483648
            %v1325 = vxor.u32 %v1313, 2147483648
            %v1326 = vxor.u32 %v1314, 2147483648
            %v1327 = vxor.u32 %v1315, 2147483648
            %v1328 = vxor.u32 %v1316, 2147483648
            %v1329 = vxor.u32 %v1317, 2147483648
            %v1330 = vxor.u32 %v1318, 2147483648
            %v1331 = vxor.u32 %v1319, 2147483648
            %v1332 = vmul.f32 %v1320, 1.442695
            %v1333 = vpow.pop %v1332
            %v1334 = vmul.f32 %v1321, 1.442695
            %v1335 = vpow.pop %v1334
            %v1336 = vmul.f32 %v1322, 1.442695
            %v1337 = vpow.pop %v1336
            %v1338 = vmul.f32 %v1323, 1.442695
            %v1339 = vpow.pop %v1338
            %v1340 = vmul.f32 %v1324, 1.442695
            %v1341 = vpow.pop %v1340
            %v1342 = vmul.f32 %v1325, 1.442695
            %v1343 = vpow.pop %v1342
            %v1344 = vmul.f32 %v1326, 1.442695
            %v1345 = vpow.pop %v1344
            %v1346 = vmul.f32 %v1327, 1.442695
            %v1347 = vpow.pop %v1346
            %v1348 = vmul.f32 %v1328, 1.442695
            %v1349 = vpow.pop %v1348
            %v1350 = vmul.f32 %v1329, 1.442695
            %v1351 = vpow.pop %v1350
            %v1352 = vmul.f32 %v1330, 1.442695
            %v1353 = vpow.pop %v1352
            %v1354 = vmul.f32 %v1331, 1.442695
            %v1355 = vpow.pop %v1354
            %v1356 = vadd.f32 %v1333, 1.0
            %v1357 = vadd.f32 %v1335, 1.0
            %v1358 = vadd.f32 %v1337, 1.0
            %v1359 = vadd.f32 %v1339, 1.0
            %v1360 = vadd.f32 %v1341, 1.0
            %v1361 = vadd.f32 %v1343, 1.0
            %v1362 = vadd.f32 %v1345, 1.0
            %v1363 = vadd.f32 %v1347, 1.0
            %v1364 = vadd.f32 %v1349, 1.0
            %v1365 = vadd.f32 %v1351, 1.0
            %v1366 = vadd.f32 %v1353, 1.0
            %v1367 = vadd.f32 %v1355, 1.0
            %v1368 = vrcp.pop %v1356
            %v1369 = vmul.f32 1.0, %v1368
            %v1370 = vrcp.pop %v1357
            %v1371 = vmul.f32 1.0, %v1370
            %v1372 = vrcp.pop %v1358
            %v1373 = vmul.f32 1.0, %v1372
            %v1374 = vrcp.pop %v1359
            %v1375 = vmul.f32 1.0, %v1374
            %v1376 = vrcp.pop %v1360
            %v1377 = vmul.f32 1.0, %v1376
            %v1378 = vrcp.pop %v1361
            %v1379 = vmul.f32 1.0, %v1378
            %v1380 = vrcp.pop %v1362
            %v1381 = vmul.f32 1.0, %v1380
            %v1382 = vrcp.pop %v1363
            %v1383 = vmul.f32 1.0, %v1382
            %v1384 = vrcp.pop %v1364
            %v1385 = vmul.f32 1.0, %v1384
            %v1386 = vrcp.pop %v1365
            %v1387 = vmul.f32 1.0, %v1386
            %v1388 = vrcp.pop %v1366
            %v1389 = vmul.f32 1.0, %v1388
            %v1390 = vrcp.pop %v1367
            %v1391 = vmul.f32 1.0, %v1390
            %v1392 = vmul.f32 %v1285, %v1190
            %v1393 = vmul.f32 %v1287, %v1192
            %v1394 = vmul.f32 %v1289, %v1196
            %v1395 = vmul.f32 %v1291, %v1198
            %v1396 = vmul.f32 %v1293, %v1202
            %v1397 = vmul.f32 %v1295, %v1204
            %v1398 = vmul.f32 %v1297, %v1208
            %v1399 = vmul.f32 %v1299, %v1210
            %v1400 = vmul.f32 %v1301, %v1214
            %v1401 = vmul.f32 %v1303, %v1216
            %v1402 = vmul.f32 %v1305, %v1220
            %v1403 = vmul.f32 %v1307, %v1222
            %v1404 = vadd.f32 %v956, %v1392
            %v1405 = vadd.f32 %v958, %v1393
            %v1406 = vadd.f32 %v962, %v1394
            %v1407 = vadd.f32 %v964, %v1395
            %v1408 = vadd.f32 %v968, %v1396
            %v1409 = vadd.f32 %v970, %v1397
            %v1410 = vadd.f32 %v974, %v1398
            %v1411 = vadd.f32 %v976, %v1399
            %v1412 = vadd.f32 %v980, %v1400
            %v1413 = vadd.f32 %v982, %v1401
            %v1414 = vadd.f32 %v986, %v1402
            %v1415 = vadd.f32 %v988, %v1403
            %v1416 = vtanh.pop %v1404
            %v1417 = vtanh.pop %v1405
            %v1418 = vtanh.pop %v1406
            %v1419 = vtanh.pop %v1407
            %v1420 = vtanh.pop %v1408
            %v1421 = vtanh.pop %v1409
            %v1422 = vtanh.pop %v1410
            %v1423 = vtanh.pop %v1411
            %v1424 = vtanh.pop %v1412
            %v1425 = vtanh.pop %v1413
            %v1426 = vtanh.pop %v1414
            %v1427 = vtanh.pop %v1415
            %v1428 = vsub.f32 1.0, %v1369
            %v1429 = vsub.f32 1.0, %v1371
            %v1430 = vsub.f32 1.0, %v1373
            %v1431 = vsub.f32 1.0, %v1375
            %v1432 = vsub.f32 1.0, %v1377
            %v1433 = vsub.f32 1.0, %v1379
            %v1434 = vsub.f32 1.0, %v1381
            %v1435 = vsub.f32 1.0, %v1383
            %v1436 = vsub.f32 1.0, %v1385
            %v1437 = vsub.f32 1.0, %v1387
            %v1438 = vsub.f32 1.0, %v1389
            %v1439 = vsub.f32 1.0, %v1391
            %v1440 = vmul.f32 %v1428, %v1416
            %v1441 = vmul.f32 %v1429, %v1417
            %v1442 = vmul.f32 %v1430, %v1418
            %v1443 = vmul.f32 %v1431, %v1419
            %v1444 = vmul.f32 %v1432, %v1420
            %v1445 = vmul.f32 %v1433, %v1421
            %v1446 = vmul.f32 %v1434, %v1422
            %v1447 = vmul.f32 %v1435, %v1423
            %v1448 = vmul.f32 %v1436, %v1424
            %v1449 = vmul.f32 %v1437, %v1425
            %v1450 = vmul.f32 %v1438, %v1426
            %v1451 = vmul.f32 %v1439, %v1427
            %v1452 = vmul.f32 %v1369, %v745
            %v1453 = vmul.f32 %v1371, %v746
            %v1454 = vmul.f32 %v1373, %v747
            %v1455 = vmul.f32 %v1375, %v748
            %v1456 = vmul.f32 %v1377, %v749
            %v1457 = vmul.f32 %v1379, %v750
            %v1458 = vmul.f32 %v1381, %v751
            %v1459 = vmul.f32 %v1383, %v752
            %v1460 = vmul.f32 %v1385, %v753
            %v1461 = vmul.f32 %v1387, %v754
            %v1462 = vmul.f32 %v1389, %v755
            %v1463 = vmul.f32 %v1391, %v756
            %v1464 = vadd.f32 %v1440, %v1452
            %v1465 = vadd.f32 %v1441, %v1453
            %v1466 = vadd.f32 %v1442, %v1454
            %v1467 = vadd.f32 %v1443, %v1455
            %v1468 = vadd.f32 %v1444, %v1456
            %v1469 = vadd.f32 %v1445, %v1457
            %v1470 = vadd.f32 %v1446, %v1458
            %v1471 = vadd.f32 %v1447, %v1459
            %v1472 = vadd.f32 %v1448, %v1460
            %v1473 = vadd.f32 %v1449, %v1461
            %v1474 = vadd.f32 %v1450, %v1462
            %v1475 = vadd.f32 %v1451, %v1463
            %1476 = vst [vmem:[#allocation8] sm:$0xff] %v1464
            %1477 = vst [vmem:[#allocation8 + $0x8] sm:$0xff] %v1465
            %1478 = vst [vmem:[#allocation8 + $0x10] sm:$0xff] %v1466
            %1479 = vst [vmem:[#allocation8 + $0x18] sm:$0xff] %v1467
            %1480 = vst [vmem:[#allocation8 + $0x20] sm:$0xff] %v1468
            %1481 = vst [vmem:[#allocation8 + $0x28] sm:$0xff] %v1469
            %1482 = vst [vmem:[#allocation8 + $0x30] sm:$0xff] %v1470
            %1483 = vst [vmem:[#allocation8 + $0x38] sm:$0xff] %v1471
            %1484 = vst [vmem:[#allocation8 + $0x40] sm:$0xff] %v1472
            %1485 = vst [vmem:[#allocation8 + $0x48] sm:$0xff] %v1473
            %1486 = vst [vmem:[#allocation8 + $0x50] sm:$0xff] %v1474
            %1487 = vst [vmem:[#allocation8 + $0x58] sm:$0xff] %v1475
            %v1488 = vsub.f32 %v1464, %v1471
            %v1489 = vsub.f32 %v1466, %v1473
            %v1490 = vsub.f32 %v1468, %v1475
            %v1491 = vadd.f32 %v1470, %v1465
            %v1492 = vadd.f32 %v1472, %v1467
            %v1493 = vadd.f32 %v1474, %v1469
            %v1495 = vsel %vm759, %v498, 0
            %v1498 = vsel %vm759, %v499, 0
            %v1501 = vsel %vm759, %v500, 0
            %v1504 = vsel %vm759, %v501, 0
            %v1507 = vsel %vm759, %v502, 0
            %v1510 = vsel %vm759, %v503, 0
            %1512 = vmatprep.subr.mxu0 %v1491
            %1513 = vmatpush1.msra.mxu0 %v1488
            %1514 = vmatprep.subr.mxu0 %v1492
            %1515 = vmatpush1.msra.mxu0 %v1489
            %1516 = vmatprep.subr.mxu0 %v1493
            %1517 = vmatpush1.msra.mxu0 %v1490
            %1518 = vmatprep.subr.mxu0 %v815
            %1519 = vmatpush1.msra.mxu0 %v815
            %1520 = vmatprep.subr.mxu0 0.0
            %1521 = vmatpush1.msra.mxu0 0.0
            %1522 = vmatprep.subr.mxu0 0.0
            %1523 = vmatpush1.msra.mxu0 0.0
            %1524 = vmatprep.subr.mxu0 0.0
            %1525 = vmatpush1.msra.mxu0 0.0
            %1526 = vmatprep.subr.mxu0 0.0
            %1527 = vmatpush1.msra.mxu0 0.0
            %1528 = vmatprep.subr.mxu0 0.0
            %1529 = vmatpush1.msra.mxu0 0.0
            %1530 = vmatprep.subr.mxu0 0.0
            %1531 = vmatpush1.msra.mxu0 0.0
            %1532 = vmatprep.subr.mxu0 0.0
            %1533 = vmatpush1.msra.mxu0 0.0
            %1534 = vmatprep.subr.mxu0 0.0
            %1535 = vmatpush1.msra.mxu0 0.0
            %1536 = vmatprep.subr.mxu0 0.0
            %1537 = vmatpush1.msra.mxu0 0.0
            %1538 = vmatprep.subr.mxu0 0.0
            %1539 = vmatpush1.msra.mxu0 0.0
            %1540 = vmatprep.subr.mxu0 0.0
            %1541 = vmatpush1.msra.mxu0 0.0
            %1542 = vmatprep.subr.mxu0 0.0
            %1543 = vmatpush1.msra.mxu0 0.0
            %1544 = vmatprep.subr.mxu0 0.0
            %1545 = vmatpush1.msra.mxu0 0.0
            %1546 = vmatprep.subr.mxu0 0.0
            %1547 = vmatpush1.msra.mxu0 0.0
            %1548 = vmatprep.subr.mxu0 0.0
            %1549 = vmatpush1.msra.mxu0 0.0
            %1550 = vmatprep.subr.mxu0 0.0
            %1551 = vmatpush1.msra.mxu0 0.0
            %1552 = vmatprep.subr.mxu0 0.0
            %1553 = vmatpush1.msra.mxu0 0.0
            %1554 = vmatprep.subr.mxu0 0.0
            %1555 = vmatpush1.msra.mxu0 0.0
            %1556 = vmatprep.subr.mxu0 0.0
            %1557 = vmatpush1.msra.mxu0 0.0
            %1558 = vmatprep.subr.mxu0 0.0
            %1559 = vmatpush1.msra.mxu0 0.0
            %1560 = vmatprep.subr.mxu0 0.0
            %1561 = vmatpush1.msra.mxu0 0.0
            %1562 = vmatprep.subr.mxu0 0.0
            %1563 = vmatpush1.msra.mxu0 0.0
            %1564 = vmatprep.subr.mxu0 0.0
            %1565 = vmatpush1.msra.mxu0 0.0
            %1566 = vmatprep.subr.mxu0 0.0
            %1567 = vmatpush1.msra.mxu0 0.0
            %1568 = vmatprep.subr.mxu0 0.0
            %1569 = vmatpush1.msra.mxu0 0.0
            %1570 = vmatprep.subr.mxu0 0.0
            %1571 = vmatpush1.msra.mxu0 0.0
            %1572 = vmatprep.subr.mxu0 0.0
            %1573 = vmatpush1.msra.mxu0 0.0
            %1574 = vmatprep.subr.mxu0 0.0
            %1575 = vmatpush1.msra.mxu0 0.0
            %1576 = vmatprep.mubr.f32.mxu0 0.0
            %1577 = vmatmul.mubr.f32.gmra.mrb[0].mxu0 %v1495
            %v1578 = vpop.f32.mrb[0].mxu0
            %v1579 = vadd.f32 0.0, %v1578
            %v1580 = vpop.f32.mrb[0].mxu0
            %1581 = vmatprep.mubr.f32.mxu0 0.0
            %1582 = vmatmul.mubr.f32.gmra.mrb[0].mxu0 %v1498
            %v1583 = vpop.f32.mrb[0].mxu0
            %v1584 = vadd.f32 0.0, %v1583
            %v1585 = vpop.f32.mrb[0].mxu0
            %1586 = vmatprep.mubr.f32.mxu0 0.0
            %1587 = vmatmul.mubr.f32.gmra.mrb[0].mxu0 %v1501
            %v1588 = vpop.f32.mrb[0].mxu0
            %v1589 = vadd.f32 0.0, %v1588
            %v1590 = vpop.f32.mrb[0].mxu0
            %1591 = vmatprep.mubr.f32.mxu0 0.0
            %1592 = vmatmul.mubr.f32.gmra.mrb[0].mxu0 %v1504
            %v1593 = vpop.f32.mrb[0].mxu0
            %v1594 = vpop.f32.mrb[0].mxu0
            %v1595 = vadd.f32 0.0, %v1594
            %1596 = vmatprep.mubr.f32.mxu0 0.0
            %1597 = vmatmul.mubr.f32.gmra.mrb[0].mxu0 %v1507
            %v1598 = vpop.f32.mrb[0].mxu0
            %v1599 = vpop.f32.mrb[0].mxu0
            %v1600 = vadd.f32 0.0, %v1599
            %1601 = vmatprep.mubr.f32.mxu0 0.0
            %1602 = vmatmul.mubr.f32.gmra.mrb[0].mxu0 %v1510
            %v1603 = vpop.f32.mrb[0].mxu0
            %v1604 = vpop.f32.mrb[0].mxu0
            %v1605 = vadd.f32 0.0, %v1604
            %1606 = vdwg.mxu0
            %vm1607 = vcmp.ge.f32.partialorder %v1579, 0.0
            %vm1608 = vcmp.ge.f32.partialorder %v1595, 0.0
            %vm1609 = vcmp.ge.f32.partialorder %v1584, 0.0
            %vm1610 = vcmp.ge.f32.partialorder %v1600, 0.0
            %vm1611 = vcmp.ge.f32.partialorder %v1589, 0.0
            %vm1612 = vcmp.ge.f32.partialorder %v1605, 0.0
            %v1613 = vmul.f32 %v522, %v1579
            %v1614 = vmul.f32 %v522, %v1595
            %v1615 = vmul.f32 %v522, %v1584
            %v1616 = vmul.f32 %v522, %v1600
            %v1617 = vmul.f32 %v522, %v1589
            %v1618 = vmul.f32 %v522, %v1605
            %v1619 = vsel %vm1607, %v1579, %v1613
            %v1620 = vsel %vm1608, %v1595, %v1614
            %v1621 = vsel %vm1609, %v1584, %v1615
            %v1622 = vsel %vm1610, %v1600, %v1616
            %v1623 = vsel %vm1611, %v1589, %v1617
            %v1624 = vsel %vm1612, %v1605, %v1618
            %vm1625 = vcmask 195584
            %v1626 = vsel %vm1625, %v504, 0
            %1628 = vmatprep.subr.mxu0 %v1620
            %1629 = vmatpush1.msra.mxu0 %v1619
            %1630 = vmatprep.subr.mxu0 %v1622
            %1631 = vmatpush1.msra.mxu0 %v1621
            %1632 = vmatprep.subr.mxu0 %v1624
            %1633 = vmatpush1.msra.mxu0 %v1623
            %1634 = vmatprep.subr.mxu0 0.0
            %1635 = vmatpush1.msra.mxu0 0.0
            %1636 = vmatprep.subr.mxu0 0.0
            %1637 = vmatpush1.msra.mxu0 0.0
            %1638 = vmatprep.subr.mxu0 0.0
            %1639 = vmatpush1.msra.mxu0 0.0
            %1640 = vmatprep.subr.mxu0 0.0
            %1641 = vmatpush1.msra.mxu0 0.0
            %1642 = vmatprep.subr.mxu0 0.0
            %1643 = vmatpush1.msra.mxu0 0.0
            %1644 = vmatprep.subr.mxu0 0.0
            %1645 = vmatpush1.msra.mxu0 0.0
            %1646 = vmatprep.subr.mxu0 0.0
            %1647 = vmatpush1.msra.mxu0 0.0
            %1648 = vmatprep.subr.mxu0 0.0
            %1649 = vmatpush1.msra.mxu0 0.0
            %1650 = vmatprep.subr.mxu0 0.0
            %1651 = vmatpush1.msra.mxu0 0.0
            %1652 = vmatprep.subr.mxu0 0.0
            %1653 = vmatpush1.msra.mxu0 0.0
            %1654 = vmatprep.subr.mxu0 0.0
            %1655 = vmatpush1.msra.mxu0 0.0
            %1656 = vmatprep.subr.mxu0 0.0
            %1657 = vmatpush1.msra.mxu0 0.0
            %1658 = vmatprep.subr.mxu0 0.0
            %1659 = vmatpush1.msra.mxu0 0.0
            %1660 = vmatprep.subr.mxu0 0.0
            %1661 = vmatpush1.msra.mxu0 0.0
            %1662 = vmatprep.subr.mxu0 0.0
            %1663 = vmatpush1.msra.mxu0 0.0
            %1664 = vmatprep.subr.mxu0 0.0
            %1665 = vmatpush1.msra.mxu0 0.0
            %1666 = vmatprep.subr.mxu0 0.0
            %1667 = vmatpush1.msra.mxu0 0.0
            %1668 = vmatprep.subr.mxu0 0.0
            %1669 = vmatpush1.msra.mxu0 0.0
            %1670 = vmatprep.subr.mxu0 0.0
            %1671 = vmatpush1.msra.mxu0 0.0
            %1672 = vmatprep.subr.mxu0 0.0
            %1673 = vmatpush1.msra.mxu0 0.0
            %1674 = vmatprep.subr.mxu0 0.0
            %1675 = vmatpush1.msra.mxu0 0.0
            %1676 = vmatprep.subr.mxu0 0.0
            %1677 = vmatpush1.msra.mxu0 0.0
            %1678 = vmatprep.subr.mxu0 0.0
            %1679 = vmatpush1.msra.mxu0 0.0
            %1680 = vmatprep.subr.mxu0 0.0
            %1681 = vmatpush1.msra.mxu0 0.0
            %1682 = vmatprep.subr.mxu0 0.0
            %1683 = vmatpush1.msra.mxu0 0.0
            %1684 = vmatprep.subr.mxu0 0.0
            %1685 = vmatpush1.msra.mxu0 0.0
            %1686 = vmatprep.subr.mxu0 0.0
            %1687 = vmatpush1.msra.mxu0 0.0
            %1688 = vmatprep.subr.mxu0 0.0
            %1689 = vmatpush1.msra.mxu0 0.0
            %1690 = vmatprep.subr.mxu0 0.0
            %1691 = vmatpush1.msra.mxu0 0.0
            %1692 = vmatprep.mubr.f32.mxu0 0.0
            %1693 = vmatmul.mubr.f32.gmra.mrb[0].mxu0 %v1626
            %v1694 = vpop.f32.mrb[0].mxu0
            %v1695 = vadd.f32 0.0, %v1694
            %v1696 = vpop.f32.mrb[0].mxu0
            %v1697 = vadd.f32 0.0, %v1696
            %1698 = vdwg.mxu0
            %v1699 = vadd.f32 %v1695, %v508
            %v1700 = vadd.f32 %v1697, %v508
            %v1701 = vlaneseq
            %v1702 = vshrl.u32 %v1701, 7
            %v1703 = vsub.s32 2, %v1702
            %v1704 = vrot.slane %v587, %v1703
            %v1705 = vmul.f32 %v1699, %v1704
            %v1706 = vlaneseq
            %v1707 = vshrl.u32 %v1706, 7
            %v1708 = vsub.s32 3, %v1707
            %v1709 = vrot.slane %v588, %v1708
            %v1710 = vmul.f32 %v1700, %v1709
            %v1712 = vrot.slane %v1710, 4
            %v1714 = vsub.f32 %v1705, %v1712
            %v1715 = vadd.f32 %v558, %v1714
            %v1716 = vmul.f32 %v1699, %v1709
            %v1717 = vmul.f32 %v1700, %v1704
            %v1719 = vrot.slane %v1717, 4
            %v1721 = vadd.f32 %v1716, %v1719
            %v1722 = vadd.f32 %v559, %v1721
            %1723 = vst [vmem:[#allocation6] sm:$0xf] %v1715
            %1724 = vst [vmem:[#allocation7] sm:$0xf] %v1722
            %v1725 = vmul.f32 %v541, %v1715
            %v1726 = vmul.f32 %v548, %v1722
            %v1727 = vsub.f32 %v1725, %v1726
            %v1728 = vsel %vm569, %v1727, 0.0
            %v1729 = vrot.slane %v1728, 4
            %v1730 = vadd.f32 %v1728, %v1729
            %v1731 = vrot.slane %v1730, 2
            %v1732 = vadd.f32 %v1730, %v1731
            %v1733 = vrot.slane %v1732, 1
            %v1734 = vadd.f32 %v1732, %v1733
            %v1735 = vmul.f32 %v541, %v1722
            %v1736 = vmul.f32 %v548, %v1715
            %v1737 = vadd.f32 %v1735, %v1736
            %v1738 = vsel %vm569, %v1737, 0.0
            %v1739 = vrot.slane %v1738, 4
            %v1740 = vadd.f32 %v1738, %v1739
            %v1741 = vrot.slane %v1740, 2
            %v1742 = vadd.f32 %v1740, %v1741
            %v1743 = vrot.slane %v1742, 1
            %v1744 = vadd.f32 %v1742, %v1743
            %s1745 = scalar_lea.vmem %s422, %s525 [#allocation12]
            %1746 = vst [vmem:[%s1745] sm:$0x1] %v1734
            %s1747 = scalar_lea.vmem %s428, %s525 [#allocation13]
            %1748 = vst [vmem:[%s1747] sm:$0x1] %v1744
          $region101: #{nkf_forward.1} parent=94 // pred_fallthru
            _
          %p1749 = scmp.eq.s32.totalorder %s553, 0
          // Predicated region
          $region102: #{nkf_forward.1} parent=94 // pred_check
            %p1750 = pneg %p1749
          $region103: #{nkf_forward.1} parent=94 // pred_check_branch
            %1752 = sbr.rel (%p1750) target = $region105
          $region104: #{nkf_forward.1} parent=94 // pred_region
            %s1753 = scalar_lea.vmem %s422, %s525 [#allocation12]
            %1754 = vst [vmem:[%s1753] sm:$0x1] 0.0
            %s1755 = scalar_lea.vmem %s428, %s525 [#allocation13]
            %1756 = vst [vmem:[%s1755] sm:$0x1] 0.0
          $region105: #{nkf_forward.1} parent=94 // pred_fallthru
            _
        $region95: #{nkf_forward.1} parent=81 // loop_footer
          %s529 = sadd.s32 1, %s525
        $region96: #{nkf_forward.1} parent=81 // loop_footer_branch
          %524 = sbr.rel target = $region92
        $region97: #{nkf_forward.1} parent=81 // loop_exit
          _
        %s1757 = sand.u32 %s203, 1
        %s1758 = sand.u32 %s203, 1
        %s1759 = smul.addr %s1758, 16
        %s1760 = scalar_lea.vmem [#allocation12], %s1759
        %s1761 = sand.u32 %s231, 1
        %s1762 = sand.u32 %s231, 1
        %s1763 = smul.addr %s1762, 16
        %s1764 = scalar_lea.vmem [#allocation13], %s1763
        // Predicated region
        $region106: #{nkf_forward.1} parent=81 // pred_check
          %p1765 = pneg %p213
        $region107: #{nkf_forward.1} parent=81 // pred_check_branch
          %1767 = sbr.rel (%p1765) target = $region109
        $region108: #{nkf_forward.1} parent=81 // pred_region
          %s1768 = smul.u32 2, %s32
          %s1769 = smul.addr %s1768, 5
          %s1770 = sadd.s32 %s31, %s1769
          %s1771 = smul.addr %s1770, 8
          %s1772 = scalar_lea.vmem %s8, %s1771
          // Predicated region
          $region110: #{nkf_forward.1} parent=108 // pred_check
            _
          $region111: #{nkf_forward.1} parent=108 // pred_check_branch
            %1774 = sbr.rel (0) target = $region113
          $region112: #{nkf_forward.1} parent=108 // pred_region
            // Predicated region
            $region114: #{nkf_forward.1} parent=112 // pred_check
              _
            $region115: #{nkf_forward.1} parent=112 // pred_check_branch
              %1776 = sbr.rel (0) target = $region117
            $region116: #{nkf_forward.1} parent=112 // pred_region
              // Predicated region
              $region129: #{nkf_forward.1} parent=116 // pred_check
                _
              $region130: #{nkf_forward.1} parent=116 // pred_check_branch
                %1793 = sbr.rel (0) target = $region132
              $region131: #{nkf_forward.1} parent=116 // pred_region
                loop: start=0, step=1, limit=1
                $region133: #{nkf_forward.1} parent=131 // loop_pre_header
                  _
                $region134: #{nkf_forward.1} parent=131 // loop_header
                  %s1795 = sphi 0, %s1799
                  %p1796 = scmp.ge.s32.totalorder %s1795, 1
                  %s1800 = sphi %s1760, %s1760
                  %s1801 = sphi %s1772, %s1772
                $region135: #{nkf_forward.1} parent=131 // loop_header_branch
                  %1798 = sbr.rel (%p1796) target = $region139
                $region136: #{nkf_forward.1} parent=131 // loop_body
                  %v1802 = vld [vmem:[%s1800] sm:$0xff]
                  %1803 = vst [vmem:[%s1801] sm:$0xff] %v1802
                  %v1804 = vld [vmem:[%s1800 + $0x8] sm:$0xff]
                  %1805 = vst [vmem:[%s1801 + $0x28] sm:$0xff] %v1804
                $region137: #{nkf_forward.1} parent=131 // loop_footer
                  %s1799 = sadd.s32 1, %s1795
                $region138: #{nkf_forward.1} parent=131 // loop_footer_branch
                  %1794 = sbr.rel target = $region134
                $region139: #{nkf_forward.1} parent=131 // loop_exit
                  _
              $region132: #{nkf_forward.1} parent=116 // pred_fallthru
                _
              // Predicated region
              $region140: #{nkf_forward.1} parent=116 // pred_check
                _
              $region141: #{nkf_forward.1} parent=116 // pred_check_branch
                %1807 = sbr.rel target = $region143
              $region142: #{nkf_forward.1} parent=116 // pred_region
                _
              $region143: #{nkf_forward.1} parent=116 // pred_fallthru
                _
            $region117: #{nkf_forward.1} parent=112 // pred_fallthru
              _
            // Predicated region
            $region118: #{nkf_forward.1} parent=112 // pred_check
              _
            $region119: #{nkf_forward.1} parent=112 // pred_check_branch
              %1778 = sbr.rel target = $region121
            $region120: #{nkf_forward.1} parent=112 // pred_region
              loop: start=0, step=1, limit=1
              $region122: #{nkf_forward.1} parent=120 // loop_pre_header
                _
              $region123: #{nkf_forward.1} parent=120 // loop_header
                %s1781 = sphi 0, %s1785
                %p1782 = scmp.ge.s32.totalorder %s1781, 1
                %s1786 = sphi %s1760, %s1760
                %s1787 = sphi %s1772, %s1772
              $region124: #{nkf_forward.1} parent=120 // loop_header_branch
                %1784 = sbr.rel (%p1782) target = $region128
              $region125: #{nkf_forward.1} parent=120 // loop_body
                %v1788 = vld [vmem:[%s1786] sm:$0xff]
                %1789 = vst [vmem:[%s1787] sm:$0xff] %v1788
                %v1790 = vld [vmem:[%s1786 + $0x8] sm:$0xff]
                %1791 = vst [vmem:[%s1787 + $0x28] sm:$0xff] %v1790
              $region126: #{nkf_forward.1} parent=120 // loop_footer
                %s1785 = sadd.s32 1, %s1781
              $region127: #{nkf_forward.1} parent=120 // loop_footer_branch
                %1780 = sbr.rel target = $region123
              $region128: #{nkf_forward.1} parent=120 // loop_exit
                _
            $region121: #{nkf_forward.1} parent=112 // pred_fallthru
              _
          $region113: #{nkf_forward.1} parent=108 // pred_fallthru
            _
          %1808 = vnop
        $region109: #{nkf_forward.1} parent=81 // pred_fallthru
          _
        // Predicated region
        $region144: #{nkf_forward.1} parent=81 // pred_check
          %p1809 = pneg %p241
        $region145: #{nkf_forward.1} parent=81 // pred_check_branch
          %1811 = sbr.rel (%p1809) target = $region147
        $region146: #{nkf_forward.1} parent=81 // pred_region
          %s1812 = smul.u32 2, %s32
          %s1813 = smul.addr %s1812, 5
          %s1814 = sadd.s32 %s31, %s1813
          %s1815 = smul.addr %s1814, 8
          %s1816 = scalar_lea.vmem %s9, %s1815
          // Predicated region
          $region148: #{nkf_forward.1} parent=146 // pred_check
            _
          $region149: #{nkf_forward.1} parent=146 // pred_check_branch
            %1818 = sbr.rel (0) target = $region151
          $region150: #{nkf_forward.1} parent=146 // pred_region
            // Predicated region
            $region152: #{nkf_forward.1} parent=150 // pred_check
              _
            $region153: #{nkf_forward.1} parent=150 // pred_check_branch
              %1820 = sbr.rel (0) target = $region155
            $region154: #{nkf_forward.1} parent=150 // pred_region
              // Predicated region
              $region167: #{nkf_forward.1} parent=154 // pred_check
                _
              $region168: #{nkf_forward.1} parent=154 // pred_check_branch
                %1837 = sbr.rel (0) target = $region170
              $region169: #{nkf_forward.1} parent=154 // pred_region
                loop: start=0, step=1, limit=1
                $region171: #{nkf_forward.1} parent=169 // loop_pre_header
                  _
                $region172: #{nkf_forward.1} parent=169 // loop_header
                  %s1839 = sphi 0, %s1843
                  %p1840 = scmp.ge.s32.totalorder %s1839, 1
                  %s1844 = sphi %s1764, %s1764
                  %s1845 = sphi %s1816, %s1816
                $region173: #{nkf_forward.1} parent=169 // loop_header_branch
                  %1842 = sbr.rel (%p1840) target = $region177
                $region174: #{nkf_forward.1} parent=169 // loop_body
                  %v1846 = vld [vmem:[%s1844] sm:$0xff]
                  %1847 = vst [vmem:[%s1845] sm:$0xff] %v1846
                  %v1848 = vld [vmem:[%s1844 + $0x8] sm:$0xff]
                  %1849 = vst [vmem:[%s1845 + $0x28] sm:$0xff] %v1848
                $region175: #{nkf_forward.1} parent=169 // loop_footer
                  %s1843 = sadd.s32 1, %s1839
                $region176: #{nkf_forward.1} parent=169 // loop_footer_branch
                  %1838 = sbr.rel target = $region172
                $region177: #{nkf_forward.1} parent=169 // loop_exit
                  _
              $region170: #{nkf_forward.1} parent=154 // pred_fallthru
                _
              // Predicated region
              $region178: #{nkf_forward.1} parent=154 // pred_check
                _
              $region179: #{nkf_forward.1} parent=154 // pred_check_branch
                %1851 = sbr.rel target = $region181
              $region180: #{nkf_forward.1} parent=154 // pred_region
                _
              $region181: #{nkf_forward.1} parent=154 // pred_fallthru
                _
            $region155: #{nkf_forward.1} parent=150 // pred_fallthru
              _
            // Predicated region
            $region156: #{nkf_forward.1} parent=150 // pred_check
              _
            $region157: #{nkf_forward.1} parent=150 // pred_check_branch
              %1822 = sbr.rel target = $region159
            $region158: #{nkf_forward.1} parent=150 // pred_region
              loop: start=0, step=1, limit=1
              $region160: #{nkf_forward.1} parent=158 // loop_pre_header
                _
              $region161: #{nkf_forward.1} parent=158 // loop_header
                %s1825 = sphi 0, %s1829
                %p1826 = scmp.ge.s32.totalorder %s1825, 1
                %s1830 = sphi %s1764, %s1764
                %s1831 = sphi %s1816, %s1816
              $region162: #{nkf_forward.1} parent=158 // loop_header_branch
                %1828 = sbr.rel (%p1826) target = $region166
              $region163: #{nkf_forward.1} parent=158 // loop_body
                %v1832 = vld [vmem:[%s1830] sm:$0xff]
                %1833 = vst [vmem:[%s1831] sm:$0xff] %v1832
                %v1834 = vld [vmem:[%s1830 + $0x8] sm:$0xff]
                %1835 = vst [vmem:[%s1831 + $0x28] sm:$0xff] %v1834
              $region164: #{nkf_forward.1} parent=158 // loop_footer
                %s1829 = sadd.s32 1, %s1825
              $region165: #{nkf_forward.1} parent=158 // loop_footer_branch
                %1824 = sbr.rel target = $region161
              $region166: #{nkf_forward.1} parent=158 // loop_exit
                _
            $region159: #{nkf_forward.1} parent=150 // pred_fallthru
              _
          $region151: #{nkf_forward.1} parent=146 // pred_fallthru
            _
          %1852 = vnop
        $region147: #{nkf_forward.1} parent=81 // pred_fallthru
          _
      $region82: #{nkf_forward.1} parent=5 // pred_fallthru
        _
      %p1853 = scmp.le.s32.totalorder 2, %s22
      // Predicated region
      $region182: #{nkf_forward.1} parent=5 // pred_check
        %p1854 = pneg %p1853
      $region183: #{nkf_forward.1} parent=5 // pred_check_branch
        %1856 = sbr.rel (%p1854) target = $region185
      $region184: #{nkf_forward.1} parent=5 // pred_region
        %s1857 = ssub.s32 %s22, 2
        // Predicated region
        $region186: #{nkf_forward.1} parent=184 // pred_check
          %p1858 = pneg %p219
        $region187: #{nkf_forward.1} parent=184 // pred_check_branch
          %1860 = sbr.rel (%p1858) target = $region189
        $region188: #{nkf_forward.1} parent=184 // pred_region
          %s1861 = sand.u32 %s204, 1
          %s1862 = sand.u32 %s204, 1
          %s1863 = smul.addr %s1862, 16
          %s1864 = scalar_lea.vmem [#allocation12], %s1863
        $region189: #{nkf_forward.1} parent=184 // pred_fallthru
          _
        // Predicated region
        $region190: #{nkf_forward.1} parent=184 // pred_check
          %p1865 = pneg %p247
        $region191: #{nkf_forward.1} parent=184 // pred_check_branch
          %1867 = sbr.rel (%p1865) target = $region193
        $region192: #{nkf_forward.1} parent=184 // pred_region
          %s1868 = sand.u32 %s232, 1
          %s1869 = sand.u32 %s232, 1
          %s1870 = smul.addr %s1869, 16
          %s1871 = scalar_lea.vmem [#allocation13], %s1870
        $region193: #{nkf_forward.1} parent=184 // pred_fallthru
          _
      $region185: #{nkf_forward.1} parent=5 // pred_fallthru
        _
    $region6: #{nkf_forward.1} parent=1 // loop_footer
      %s26 = sadd.s32 1, %s22
    $region7: #{nkf_forward.1} parent=1 // loop_footer_branch
      %21 = sbr.rel target = $region3
    $region8: #{nkf_forward.1} parent=1 // loop_exit
      _

// kernel: mul.36
$region0: #{mul.36}
  #allocation0 [shape = 's32[1]{0}', space=sflag, size = 0x4, scoped, tag = 'scoped memory for mul.36']
  %s0 = inlined_call_operand.vmem [shape: f32[1024], index: 0, kind: input, shape index: {}]
  %s1 = inlined_call_operand.vmem [shape: f32[9,1024], index: 1, kind: output, shape index: {}]
  // Predicated region
  $region2: #{mul.36} parent=0 // pred_check
    _
  $region3: #{mul.36} parent=0 // pred_check_branch
    %3 = sbr.rel (0) target = $region5
  $region4: #{mul.36} parent=0 // pred_region
    _
  $region5: #{mul.36} parent=0 // pred_fallthru
    _
  %v4 = vld [vmem:[%s0] ss:$0 sm:$0xff]
  %5 = vst [vmem:[%s1] sm:$0xff] %v4
  %s6 = scalar_lea.vmem %s1, 64
  %7 = vst [vmem:[%s6] sm:$0xff] %v4
  %s8 = scalar_lea.vmem %s0, 1
  %v9 = vld [vmem:[%s8] ss:$0 sm:$0xff]
  %s10 = scalar_lea.vmem %s1, 8
  %11 = vst [vmem:[%s10] sm:$0xff] %v9
  %s12 = scalar_lea.vmem %s1, 72
  %13 = vst [vmem:[%s12] sm:$0xff] %v9
  %s14 = scalar_lea.vmem %s0, 2
  %v15 = vld [vmem:[%s14] ss:$0 sm:$0xff]
  %s16 = scalar_lea.vmem %s1, 16
  %17 = vst [vmem:[%s16] sm:$0xff] %v15
  %s18 = scalar_lea.vmem %s1, 80
  %19 = vst [vmem:[%s18] sm:$0xff] %v15
  %s20 = scalar_lea.vmem %s0, 3
  %v21 = vld [vmem:[%s20] ss:$0 sm:$0xff]
  %s22 = scalar_lea.vmem %s1, 24
  %23 = vst [vmem:[%s22] sm:$0xff] %v21
  %s24 = scalar_lea.vmem %s1, 88
  %25 = vst [vmem:[%s24] sm:$0xff] %v21
  %s26 = scalar_lea.vmem %s0, 4
  %v27 = vld [vmem:[%s26] ss:$0 sm:$0xff]
  %s28 = scalar_lea.vmem %s1, 32
  %29 = vst [vmem:[%s28] sm:$0xff] %v27
  %s30 = scalar_lea.vmem %s1, 96
  %31 = vst [vmem:[%s30] sm:$0xff] %v27
  %s32 = scalar_lea.vmem %s0, 5
  %v33 = vld [vmem:[%s32] ss:$0 sm:$0xff]
  %s34 = scalar_lea.vmem %s1, 40
  %35 = vst [vmem:[%s34] sm:$0xff] %v33
  %s36 = scalar_lea.vmem %s1, 104
  %37 = vst [vmem:[%s36] sm:$0xff] %v33
  %s38 = scalar_lea.vmem %s0, 6
  %v39 = vld [vmem:[%s38] ss:$0 sm:$0xff]
  %s40 = scalar_lea.vmem %s1, 48
  %41 = vst [vmem:[%s40] sm:$0xff] %v39
  %s42 = scalar_lea.vmem %s1, 112
  %43 = vst [vmem:[%s42] sm:$0xff] %v39
  %s44 = scalar_lea.vmem %s0, 7
  %v45 = vld [vmem:[%s44] ss:$0 sm:$0xff]
  %s46 = scalar_lea.vmem %s1, 56
  %47 = vst [vmem:[%s46] sm:$0xff] %v45
  %s48 = scalar_lea.vmem %s1, 120
  %49 = vst [vmem:[%s48] sm:$0xff] %v45

</llo_original>
